<compile_context>
chip_gen: v7x
topology: tpu7x:2x2x1
jax: 0.10.0
libtpu: 0.0.40
codegen_flags: <defaults>
</compile_context>

<pallas_src>
import math
import jax
import jax.numpy as jnp
from jax import lax
from jax.experimental import pallas as pl
from jax.experimental.pallas import tpu as pltpu

# problem sizes (match the PyTorch module)
INPUT_SIZE = 5
HIDDEN = 100
OUTPUT = 1

# padded sizes for TPU lanes
HP = 128          # padded hidden per gate
IP = 8            # padded input feature dim
G4 = 4 * HP       # padded gate width: [i, f, o, g] blocks of HP each
S3 = 3 * HP       # width of the sigmoid-activated block (i, f, o)

# Fully unroll the time loop up to this many steps (static slices, best
# scheduling); beyond that use fori_loop with partial unroll to bound
# compile time.
UNROLL_MAX = 64

# padded gate order inside the kernel is [i, f, o, g];
# PyTorch nn.LSTM row order is       [i, f, g, o].
_GATE_PERM = (0, 1, 3, 2)   # padded slot p takes PyTorch gate _GATE_PERM[p]


def lstm_kernel(x_ref, wih_ref, whh_ref, b_ref, wl_ref, bl_ref, out_ref, xw_ref):
    """Single-call kernel: precompute x @ W_ih^T + b, then run the recurrence.

    x_ref   : (T, IP)        padded inputs
    wih_ref : (IP, 4*HP)     padded, transposed input->gate weights ([i,f,o,g])
    whh_ref : (HP, 4*HP)     padded, transposed hidden->gate weights ([i,f,o,g])
    b_ref   : (1, 4*HP)      combined (b_ih + b_hh), padded ([i,f,o,g])
    wl_ref  : (1, HP)        padded linear weight row
    bl_ref  : (1, 1)         linear bias
    out_ref : (1, 1)         prediction at the last timestep
    xw_ref  : (T, 4*HP)      VMEM scratch for the input-projection (long-T path)
    """
    T = x_ref.shape[0]

    # Input projection for all timesteps at once (one MXU call).
    xw = (
        jnp.dot(x_ref[...], wih_ref[...], preferred_element_type=jnp.float32)
        + b_ref[...]
    )                                                       # (T, 4*HP) value

    # Hoist the recurrent weight matrix out of the loop.
    whh = whh_ref[...]                                      # (HP, 4*HP)

    def cell(pre, h, c):
        # pre: (1, 4*HP) x-projection for this timestep (bias already folded).
        gates = pre + jnp.dot(h, whh, preferred_element_type=jnp.float32)
        # Gate layout [i, f, o, g]: one sigmoid block (via the tanh identity,
        # a single EUP op class) + one tanh block.  Padded lanes have gate
        # pre-activation exactly 0 -> i=f=o=0.5, g=0 -> padded c/h stay 0.
        sig = 0.5 * (jnp.tanh(0.5 * gates[:, :S3]) + 1.0)   # (1, 3*HP)
        i = sig[:, 0 * HP:1 * HP]
        f = sig[:, 1 * HP:2 * HP]
        o = sig[:, 2 * HP:3 * HP]
        g = jnp.tanh(gates[:, S3:])                         # (1, HP)
        c = f * c + i * g
        h = o * jnp.tanh(c)
        return h, c

    h = jnp.zeros((1, HP), jnp.float32)
    c = jnp.zeros((1, HP), jnp.float32)

    if T <= UNROLL_MAX:
        # Fully unrolled: xw stays vreg-resident, static slices, cross-step
        # scheduling visibility.  (Scratch ref is unused on this path.)
        for t in range(T):
            h, c = cell(xw[t:t + 1, :], h, c)
    else:
        # Long sequences: stash the projection in VMEM scratch and run a
        # partially-unrolled fori_loop to keep compile time sane.
        xw_ref[...] = xw

        def body(t, hc):
            return cell(xw_ref[pl.ds(t, 1), :], hc[0], hc[1])

        h, c = lax.fori_loop(0, T, body, (h, c), unroll=8)

    # Final Linear(100, 1): lane reduce on the VPU/XLU (padded lanes of wl are
    # zero) instead of a 1x128x1 MXU product.
    out_ref[...] = (
        jnp.sum(h * wl_ref[...], axis=-1, keepdims=True) + bl_ref[...]
    )


def _pad_gate_rows(w):
    """(4*HIDDEN, d) in PyTorch order [i,f,g,o] -> (4*HP, d) in kernel order
    [i,f,o,g], each real gate block at offsets 0, HP, 2*HP, 3*HP (rest zero)."""
    out = jnp.zeros((G4, w.shape[1]), w.dtype)
    for p, src in enumerate(_GATE_PERM):
        out = out.at[p * HP:p * HP + HIDDEN].set(
            w[src * HIDDEN:(src + 1) * HIDDEN])
    return out


def lstm_forward_pallas(x, params):
    """x: (T, INPUT_SIZE) float32 -> prediction of shape (OUTPUT,) = (1,)."""
    w_ih, w_hh, b_ih, b_hh, w_lin, b_lin = params
    T = x.shape[0]

    # ---- pad / transpose / gate-reorder parameters (plain-JAX glue) ----
    x_p = jnp.zeros((T, IP), jnp.float32).at[:, :INPUT_SIZE].set(x)

    wih_p = _pad_gate_rows(w_ih)                                  # (G4, INPUT_SIZE)
    wih_p = jnp.zeros((G4, IP), jnp.float32).at[:, :INPUT_SIZE].set(wih_p)
    wih_p = wih_p.T                                               # (IP, G4)

    whh_p = _pad_gate_rows(w_hh)                                  # (G4, HIDDEN)
    whh_p = jnp.zeros((G4, HP), jnp.float32).at[:, :HIDDEN].set(whh_p)
    whh_p = whh_p.T                                               # (HP, G4)

    b_p = _pad_gate_rows((b_ih + b_hh)[:, None])[:, 0].reshape(1, G4)

    wl_p = jnp.zeros((1, HP), jnp.float32).at[:, :HIDDEN].set(w_lin)  # (1, HP)
    bl_p = b_lin.reshape(1, 1).astype(jnp.float32)

    vmem = pl.BlockSpec(memory_space=pltpu.MemorySpace.VMEM)
    out = pl.pallas_call(
        lstm_kernel,
        out_shape=jax.ShapeDtypeStruct((1, 1), jnp.float32),
        in_specs=[vmem] * 6,
        out_specs=vmem,
        scratch_shapes=[pltpu.VMEM((T, G4), jnp.float32)],
    )(x_p, wih_p, whh_p, b_p, wl_p, bl_p)
    return out[0]  # shape (1,) == predictions[-1] in the PyTorch module


def lstm_forward_ref(x, params):
    """Pure-JAX reference replicating torch.nn.LSTM (gates i,f,g,o) + Linear."""
    w_ih, w_hh, b_ih, b_hh, w_lin, b_lin = params
    H = HIDDEN

    def step(carry, xt):
        h, c = carry
        gates = w_ih @ xt + b_ih + w_hh @ h + b_hh
        i = jax.nn.sigmoid(gates[0 * H:1 * H])
        f = jax.nn.sigmoid(gates[1 * H:2 * H])
        g = jnp.tanh(gates[2 * H:3 * H])
        o = jax.nn.sigmoid(gates[3 * H:4 * H])
        c = f * c + i * g
        h = o * jnp.tanh(c)
        return (h, c), h

    (h, c), hs = lax.scan(step, (jnp.zeros(H), jnp.zeros(H)), x)
    preds = hs @ w_lin.T + b_lin
    return preds[-1]


def init_params(key):
    """Deterministic init matching the PyTorch default shapes
    (uniform(-1/sqrt(H), 1/sqrt(H)))."""
    ks = jax.random.split(key, 6)
    bound = 1.0 / math.sqrt(HIDDEN)
    w_ih = jax.random.uniform(ks[0], (4 * HIDDEN, INPUT_SIZE), jnp.float32, -bound, bound)
    w_hh = jax.random.uniform(ks[1], (4 * HIDDEN, HIDDEN), jnp.float32, -bound, bound)
    b_ih = jax.random.uniform(ks[2], (4 * HIDDEN,), jnp.float32, -bound, bound)
    b_hh = jax.random.uniform(ks[3], (4 * HIDDEN,), jnp.float32, -bound, bound)
    w_lin = jax.random.uniform(ks[4], (OUTPUT, HIDDEN), jnp.float32, -bound, bound)
    b_lin = jax.random.uniform(ks[5], (OUTPUT,), jnp.float32, -bound, bound)
    return (w_ih, w_hh, b_ih, b_hh, w_lin, b_lin)


if __name__ == "__main__":
    key = jax.random.PRNGKey(0)
    k_param, k_x = jax.random.split(key)

    params = init_params(k_param)
    T = 8
    x = jax.random.normal(k_x, (T, INPUT_SIZE), jnp.float32)

    fwd = jax.jit(lstm_forward_pallas)
    out = jax.block_until_ready(fwd(x, params))
    ref = jax.block_until_ready(lstm_forward_ref(x, params))

    assert out.shape == (OUTPUT,)
    assert jnp.allclose(out, ref, atol=1e-5, rtol=1e-5), (out, ref)
    print("KERNEL_OK")
</pallas_src>

<mosaic_0001>
module attributes {stable_mosaic.version = 11 : i64} {
  func.func @lstm_kernel(%arg0: memref<8x8xf32, #tpu.memory_space<vmem>>, %arg1: memref<8x512xf32, #tpu.memory_space<vmem>>, %arg2: memref<128x512xf32, #tpu.memory_space<vmem>>, %arg3: memref<1x512xf32, #tpu.memory_space<vmem>>, %arg4: memref<1x128xf32, #tpu.memory_space<vmem>>, %arg5: memref<1x1xf32, #tpu.memory_space<vmem>>, %arg6: memref<1x1xf32, #tpu.memory_space<vmem>>, %arg7: memref<8x512xf32, #tpu.memory_space<vmem>>) attributes {dimension_semantics = [], scalar_prefetch = 0 : i64, scratch_operands = 1 : i64, tpu.core_type = #tpu.core_type<tc>} {
    %c0 = arith.constant 0 : index
    %c0_0 = arith.constant 0 : index
    %0 = vector.load %arg0[%c0, %c0_0] : memref<8x8xf32, #tpu.memory_space<vmem>>, vector<8x8xf32>
    %c0_1 = arith.constant 0 : index
    %c0_2 = arith.constant 0 : index
    %1 = vector.load %arg1[%c0_1, %c0_2] : memref<8x512xf32, #tpu.memory_space<vmem>>, vector<8x512xf32>
    %cst = arith.constant dense<0.000000e+00> : vector<8x512xf32>
    %2 = tpu.matmul %0, %1, %cst {dimension_numbers = #tpu.dot_dimension_numbers<[1], [0], [0], [1], [0, 0, 1, 1], [], []>} : vector<8x8xf32>, vector<8x512xf32>, vector<8x512xf32> -> vector<8x512xf32>
    %c0_3 = arith.constant 0 : index
    %c0_4 = arith.constant 0 : index
    %3 = vector.load %arg3[%c0_3, %c0_4] : memref<1x512xf32, #tpu.memory_space<vmem>>, vector<1x512xf32>
    %4 = vector.broadcast %3 : vector<1x512xf32> to vector<8x512xf32>
    %5 = arith.addf %2, %4 : vector<8x512xf32>
    %c0_5 = arith.constant 0 : index
    %c0_6 = arith.constant 0 : index
    %6 = vector.load %arg2[%c0_5, %c0_6] : memref<128x512xf32, #tpu.memory_space<vmem>>, vector<128x512xf32>
    %cst_7 = arith.constant 0.000000e+00 : f32
    %7 = vector.broadcast %cst_7 : f32 to vector<1x128xf32>
    %cst_8 = arith.constant 0.000000e+00 : f32
    %8 = vector.broadcast %cst_8 : f32 to vector<1x128xf32>
    %9 = vector.extract_strided_slice %5 {offsets = [0, 0], sizes = [1, 512], strides = [1, 1]} : vector<8x512xf32> to vector<1x512xf32>
    %cst_9 = arith.constant dense<0.000000e+00> : vector<1x512xf32>
    %10 = tpu.matmul %7, %6, %cst_9 {dimension_numbers = #tpu.dot_dimension_numbers<[1], [0], [0], [1], [0, 0, 1, 1], [], []>} : vector<1x128xf32>, vector<128x512xf32>, vector<1x512xf32> -> vector<1x512xf32>
    %11 = arith.addf %9, %10 : vector<1x512xf32>
    %12 = vector.extract_strided_slice %11 {offsets = [0, 0], sizes = [1, 384], strides = [1, 1]} : vector<1x512xf32> to vector<1x384xf32>
    %cst_10 = arith.constant 5.000000e-01 : f32
    %13 = vector.broadcast %cst_10 : f32 to vector<1x384xf32>
    %14 = arith.mulf %13, %12 : vector<1x384xf32>
    %15 = math.tanh %14 : vector<1x384xf32>
    %cst_11 = arith.constant 1.000000e+00 : f32
    %16 = vector.broadcast %cst_11 : f32 to vector<1x384xf32>
    %17 = arith.addf %15, %16 : vector<1x384xf32>
    %cst_12 = arith.constant 5.000000e-01 : f32
    %18 = vector.broadcast %cst_12 : f32 to vector<1x384xf32>
    %19 = arith.mulf %18, %17 : vector<1x384xf32>
    %20 = vector.extract_strided_slice %19 {offsets = [0, 0], sizes = [1, 128], strides = [1, 1]} : vector<1x384xf32> to vector<1x128xf32>
    %21 = vector.extract_strided_slice %19 {offsets = [0, 128], sizes = [1, 128], strides = [1, 1]} : vector<1x384xf32> to vector<1x128xf32>
    %22 = vector.extract_strided_slice %19 {offsets = [0, 256], sizes = [1, 128], strides = [1, 1]} : vector<1x384xf32> to vector<1x128xf32>
    %23 = vector.extract_strided_slice %11 {offsets = [0, 384], sizes = [1, 128], strides = [1, 1]} : vector<1x512xf32> to vector<1x128xf32>
    %24 = math.tanh %23 : vector<1x128xf32>
    %25 = arith.mulf %21, %8 : vector<1x128xf32>
    %26 = arith.mulf %20, %24 : vector<1x128xf32>
    %27 = arith.addf %25, %26 : vector<1x128xf32>
    %28 = math.tanh %27 : vector<1x128xf32>
    %29 = arith.mulf %22, %28 : vector<1x128xf32>
    %30 = vector.extract_strided_slice %5 {offsets = [1, 0], sizes = [1, 512], strides = [1, 1]} : vector<8x512xf32> to vector<1x512xf32>
    %cst_13 = arith.constant dense<0.000000e+00> : vector<1x512xf32>
    %31 = tpu.matmul %29, %6, %cst_13 {dimension_numbers = #tpu.dot_dimension_numbers<[1], [0], [0], [1], [0, 0, 1, 1], [], []>} : vector<1x128xf32>, vector<128x512xf32>, vector<1x512xf32> -> vector<1x512xf32>
    %32 = arith.addf %30, %31 : vector<1x512xf32>
    %33 = vector.extract_strided_slice %32 {offsets = [0, 0], sizes = [1, 384], strides = [1, 1]} : vector<1x512xf32> to vector<1x384xf32>
    %cst_14 = arith.constant 5.000000e-01 : f32
    %34 = vector.broadcast %cst_14 : f32 to vector<1x384xf32>
    %35 = arith.mulf %34, %33 : vector<1x384xf32>
    %36 = math.tanh %35 : vector<1x384xf32>
    %cst_15 = arith.constant 1.000000e+00 : f32
    %37 = vector.broadcast %cst_15 : f32 to vector<1x384xf32>
    %38 = arith.addf %36, %37 : vector<1x384xf32>
    %cst_16 = arith.constant 5.000000e-01 : f32
    %39 = vector.broadcast %cst_16 : f32 to vector<1x384xf32>
    %40 = arith.mulf %39, %38 : vector<1x384xf32>
    %41 = vector.extract_strided_slice %40 {offsets = [0, 0], sizes = [1, 128], strides = [1, 1]} : vector<1x384xf32> to vector<1x128xf32>
    %42 = vector.extract_strided_slice %40 {offsets = [0, 128], sizes = [1, 128], strides = [1, 1]} : vector<1x384xf32> to vector<1x128xf32>
    %43 = vector.extract_strided_slice %40 {offsets = [0, 256], sizes = [1, 128], strides = [1, 1]} : vector<1x384xf32> to vector<1x128xf32>
    %44 = vector.extract_strided_slice %32 {offsets = [0, 384], sizes = [1, 128], strides = [1, 1]} : vector<1x512xf32> to vector<1x128xf32>
    %45 = math.tanh %44 : vector<1x128xf32>
    %46 = arith.mulf %42, %27 : vector<1x128xf32>
    %47 = arith.mulf %41, %45 : vector<1x128xf32>
    %48 = arith.addf %46, %47 : vector<1x128xf32>
    %49 = math.tanh %48 : vector<1x128xf32>
    %50 = arith.mulf %43, %49 : vector<1x128xf32>
    %51 = vector.extract_strided_slice %5 {offsets = [2, 0], sizes = [1, 512], strides = [1, 1]} : vector<8x512xf32> to vector<1x512xf32>
    %cst_17 = arith.constant dense<0.000000e+00> : vector<1x512xf32>
    %52 = tpu.matmul %50, %6, %cst_17 {dimension_numbers = #tpu.dot_dimension_numbers<[1], [0], [0], [1], [0, 0, 1, 1], [], []>} : vector<1x128xf32>, vector<128x512xf32>, vector<1x512xf32> -> vector<1x512xf32>
    %53 = arith.addf %51, %52 : vector<1x512xf32>
    %54 = vector.extract_strided_slice %53 {offsets = [0, 0], sizes = [1, 384], strides = [1, 1]} : vector<1x512xf32> to vector<1x384xf32>
    %cst_18 = arith.constant 5.000000e-01 : f32
    %55 = vector.broadcast %cst_18 : f32 to vector<1x384xf32>
    %56 = arith.mulf %55, %54 : vector<1x384xf32>
    %57 = math.tanh %56 : vector<1x384xf32>
    %cst_19 = arith.constant 1.000000e+00 : f32
    %58 = vector.broadcast %cst_19 : f32 to vector<1x384xf32>
    %59 = arith.addf %57, %58 : vector<1x384xf32>
    %cst_20 = arith.constant 5.000000e-01 : f32
    %60 = vector.broadcast %cst_20 : f32 to vector<1x384xf32>
    %61 = arith.mulf %60, %59 : vector<1x384xf32>
    %62 = vector.extract_strided_slice %61 {offsets = [0, 0], sizes = [1, 128], strides = [1, 1]} : vector<1x384xf32> to vector<1x128xf32>
    %63 = vector.extract_strided_slice %61 {offsets = [0, 128], sizes = [1, 128], strides = [1, 1]} : vector<1x384xf32> to vector<1x128xf32>
    %64 = vector.extract_strided_slice %61 {offsets = [0, 256], sizes = [1, 128], strides = [1, 1]} : vector<1x384xf32> to vector<1x128xf32>
    %65 = vector.extract_strided_slice %53 {offsets = [0, 384], sizes = [1, 128], strides = [1, 1]} : vector<1x512xf32> to vector<1x128xf32>
    %66 = math.tanh %65 : vector<1x128xf32>
    %67 = arith.mulf %63, %48 : vector<1x128xf32>
    %68 = arith.mulf %62, %66 : vector<1x128xf32>
    %69 = arith.addf %67, %68 : vector<1x128xf32>
    %70 = math.tanh %69 : vector<1x128xf32>
    %71 = arith.mulf %64, %70 : vector<1x128xf32>
    %72 = vector.extract_strided_slice %5 {offsets = [3, 0], sizes = [1, 512], strides = [1, 1]} : vector<8x512xf32> to vector<1x512xf32>
    %cst_21 = arith.constant dense<0.000000e+00> : vector<1x512xf32>
    %73 = tpu.matmul %71, %6, %cst_21 {dimension_numbers = #tpu.dot_dimension_numbers<[1], [0], [0], [1], [0, 0, 1, 1], [], []>} : vector<1x128xf32>, vector<128x512xf32>, vector<1x512xf32> -> vector<1x512xf32>
    %74 = arith.addf %72, %73 : vector<1x512xf32>
    %75 = vector.extract_strided_slice %74 {offsets = [0, 0], sizes = [1, 384], strides = [1, 1]} : vector<1x512xf32> to vector<1x384xf32>
    %cst_22 = arith.constant 5.000000e-01 : f32
    %76 = vector.broadcast %cst_22 : f32 to vector<1x384xf32>
    %77 = arith.mulf %76, %75 : vector<1x384xf32>
    %78 = math.tanh %77 : vector<1x384xf32>
    %cst_23 = arith.constant 1.000000e+00 : f32
    %79 = vector.broadcast %cst_23 : f32 to vector<1x384xf32>
    %80 = arith.addf %78, %79 : vector<1x384xf32>
    %cst_24 = arith.constant 5.000000e-01 : f32
    %81 = vector.broadcast %cst_24 : f32 to vector<1x384xf32>
    %82 = arith.mulf %81, %80 : vector<1x384xf32>
    %83 = vector.extract_strided_slice %82 {offsets = [0, 0], sizes = [1, 128], strides = [1, 1]} : vector<1x384xf32> to vector<1x128xf32>
    %84 = vector.extract_strided_slice %82 {offsets = [0, 128], sizes = [1, 128], strides = [1, 1]} : vector<1x384xf32> to vector<1x128xf32>
    %85 = vector.extract_strided_slice %82 {offsets = [0, 256], sizes = [1, 128], strides = [1, 1]} : vector<1x384xf32> to vector<1x128xf32>
    %86 = vector.extract_strided_slice %74 {offsets = [0, 384], sizes = [1, 128], strides = [1, 1]} : vector<1x512xf32> to vector<1x128xf32>
    %87 = math.tanh %86 : vector<1x128xf32>
    %88 = arith.mulf %84, %69 : vector<1x128xf32>
    %89 = arith.mulf %83, %87 : vector<1x128xf32>
    %90 = arith.addf %88, %89 : vector<1x128xf32>
    %91 = math.tanh %90 : vector<1x128xf32>
    %92 = arith.mulf %85, %91 : vector<1x128xf32>
    %93 = vector.extract_strided_slice %5 {offsets = [4, 0], sizes = [1, 512], strides = [1, 1]} : vector<8x512xf32> to vector<1x512xf32>
    %cst_25 = arith.constant dense<0.000000e+00> : vector<1x512xf32>
    %94 = tpu.matmul %92, %6, %cst_25 {dimension_numbers = #tpu.dot_dimension_numbers<[1], [0], [0], [1], [0, 0, 1, 1], [], []>} : vector<1x128xf32>, vector<128x512xf32>, vector<1x512xf32> -> vector<1x512xf32>
    %95 = arith.addf %93, %94 : vector<1x512xf32>
    %96 = vector.extract_strided_slice %95 {offsets = [0, 0], sizes = [1, 384], strides = [1, 1]} : vector<1x512xf32> to vector<1x384xf32>
    %cst_26 = arith.constant 5.000000e-01 : f32
    %97 = vector.broadcast %cst_26 : f32 to vector<1x384xf32>
    %98 = arith.mulf %97, %96 : vector<1x384xf32>
    %99 = math.tanh %98 : vector<1x384xf32>
    %cst_27 = arith.constant 1.000000e+00 : f32
    %100 = vector.broadcast %cst_27 : f32 to vector<1x384xf32>
    %101 = arith.addf %99, %100 : vector<1x384xf32>
    %cst_28 = arith.constant 5.000000e-01 : f32
    %102 = vector.broadcast %cst_28 : f32 to vector<1x384xf32>
    %103 = arith.mulf %102, %101 : vector<1x384xf32>
    %104 = vector.extract_strided_slice %103 {offsets = [0, 0], sizes = [1, 128], strides = [1, 1]} : vector<1x384xf32> to vector<1x128xf32>
    %105 = vector.extract_strided_slice %103 {offsets = [0, 128], sizes = [1, 128], strides = [1, 1]} : vector<1x384xf32> to vector<1x128xf32>
    %106 = vector.extract_strided_slice %103 {offsets = [0, 256], sizes = [1, 128], strides = [1, 1]} : vector<1x384xf32> to vector<1x128xf32>
    %107 = vector.extract_strided_slice %95 {offsets = [0, 384], sizes = [1, 128], strides = [1, 1]} : vector<1x512xf32> to vector<1x128xf32>
    %108 = math.tanh %107 : vector<1x128xf32>
    %109 = arith.mulf %105, %90 : vector<1x128xf32>
    %110 = arith.mulf %104, %108 : vector<1x128xf32>
    %111 = arith.addf %109, %110 : vector<1x128xf32>
    %112 = math.tanh %111 : vector<1x128xf32>
    %113 = arith.mulf %106, %112 : vector<1x128xf32>
    %114 = vector.extract_strided_slice %5 {offsets = [5, 0], sizes = [1, 512], strides = [1, 1]} : vector<8x512xf32> to vector<1x512xf32>
    %cst_29 = arith.constant dense<0.000000e+00> : vector<1x512xf32>
    %115 = tpu.matmul %113, %6, %cst_29 {dimension_numbers = #tpu.dot_dimension_numbers<[1], [0], [0], [1], [0, 0, 1, 1], [], []>} : vector<1x128xf32>, vector<128x512xf32>, vector<1x512xf32> -> vector<1x512xf32>
    %116 = arith.addf %114, %115 : vector<1x512xf32>
    %117 = vector.extract_strided_slice %116 {offsets = [0, 0], sizes = [1, 384], strides = [1, 1]} : vector<1x512xf32> to vector<1x384xf32>
    %cst_30 = arith.constant 5.000000e-01 : f32
    %118 = vector.broadcast %cst_30 : f32 to vector<1x384xf32>
    %119 = arith.mulf %118, %117 : vector<1x384xf32>
    %120 = math.tanh %119 : vector<1x384xf32>
    %cst_31 = arith.constant 1.000000e+00 : f32
    %121 = vector.broadcast %cst_31 : f32 to vector<1x384xf32>
    %122 = arith.addf %120, %121 : vector<1x384xf32>
    %cst_32 = arith.constant 5.000000e-01 : f32
    %123 = vector.broadcast %cst_32 : f32 to vector<1x384xf32>
    %124 = arith.mulf %123, %122 : vector<1x384xf32>
    %125 = vector.extract_strided_slice %124 {offsets = [0, 0], sizes = [1, 128], strides = [1, 1]} : vector<1x384xf32> to vector<1x128xf32>
    %126 = vector.extract_strided_slice %124 {offsets = [0, 128], sizes = [1, 128], strides = [1, 1]} : vector<1x384xf32> to vector<1x128xf32>
    %127 = vector.extract_strided_slice %124 {offsets = [0, 256], sizes = [1, 128], strides = [1, 1]} : vector<1x384xf32> to vector<1x128xf32>
    %128 = vector.extract_strided_slice %116 {offsets = [0, 384], sizes = [1, 128], strides = [1, 1]} : vector<1x512xf32> to vector<1x128xf32>
    %129 = math.tanh %128 : vector<1x128xf32>
    %130 = arith.mulf %126, %111 : vector<1x128xf32>
    %131 = arith.mulf %125, %129 : vector<1x128xf32>
    %132 = arith.addf %130, %131 : vector<1x128xf32>
    %133 = math.tanh %132 : vector<1x128xf32>
    %134 = arith.mulf %127, %133 : vector<1x128xf32>
    %135 = vector.extract_strided_slice %5 {offsets = [6, 0], sizes = [1, 512], strides = [1, 1]} : vector<8x512xf32> to vector<1x512xf32>
    %cst_33 = arith.constant dense<0.000000e+00> : vector<1x512xf32>
    %136 = tpu.matmul %134, %6, %cst_33 {dimension_numbers = #tpu.dot_dimension_numbers<[1], [0], [0], [1], [0, 0, 1, 1], [], []>} : vector<1x128xf32>, vector<128x512xf32>, vector<1x512xf32> -> vector<1x512xf32>
    %137 = arith.addf %135, %136 : vector<1x512xf32>
    %138 = vector.extract_strided_slice %137 {offsets = [0, 0], sizes = [1, 384], strides = [1, 1]} : vector<1x512xf32> to vector<1x384xf32>
    %cst_34 = arith.constant 5.000000e-01 : f32
    %139 = vector.broadcast %cst_34 : f32 to vector<1x384xf32>
    %140 = arith.mulf %139, %138 : vector<1x384xf32>
    %141 = math.tanh %140 : vector<1x384xf32>
    %cst_35 = arith.constant 1.000000e+00 : f32
    %142 = vector.broadcast %cst_35 : f32 to vector<1x384xf32>
    %143 = arith.addf %141, %142 : vector<1x384xf32>
    %cst_36 = arith.constant 5.000000e-01 : f32
    %144 = vector.broadcast %cst_36 : f32 to vector<1x384xf32>
    %145 = arith.mulf %144, %143 : vector<1x384xf32>
    %146 = vector.extract_strided_slice %145 {offsets = [0, 0], sizes = [1, 128], strides = [1, 1]} : vector<1x384xf32> to vector<1x128xf32>
    %147 = vector.extract_strided_slice %145 {offsets = [0, 128], sizes = [1, 128], strides = [1, 1]} : vector<1x384xf32> to vector<1x128xf32>
    %148 = vector.extract_strided_slice %145 {offsets = [0, 256], sizes = [1, 128], strides = [1, 1]} : vector<1x384xf32> to vector<1x128xf32>
    %149 = vector.extract_strided_slice %137 {offsets = [0, 384], sizes = [1, 128], strides = [1, 1]} : vector<1x512xf32> to vector<1x128xf32>
    %150 = math.tanh %149 : vector<1x128xf32>
    %151 = arith.mulf %147, %132 : vector<1x128xf32>
    %152 = arith.mulf %146, %150 : vector<1x128xf32>
    %153 = arith.addf %151, %152 : vector<1x128xf32>
    %154 = math.tanh %153 : vector<1x128xf32>
    %155 = arith.mulf %148, %154 : vector<1x128xf32>
    %156 = vector.extract_strided_slice %5 {offsets = [7, 0], sizes = [1, 512], strides = [1, 1]} : vector<8x512xf32> to vector<1x512xf32>
    %cst_37 = arith.constant dense<0.000000e+00> : vector<1x512xf32>
    %157 = tpu.matmul %155, %6, %cst_37 {dimension_numbers = #tpu.dot_dimension_numbers<[1], [0], [0], [1], [0, 0, 1, 1], [], []>} : vector<1x128xf32>, vector<128x512xf32>, vector<1x512xf32> -> vector<1x512xf32>
    %158 = arith.addf %156, %157 : vector<1x512xf32>
    %159 = vector.extract_strided_slice %158 {offsets = [0, 0], sizes = [1, 384], strides = [1, 1]} : vector<1x512xf32> to vector<1x384xf32>
    %cst_38 = arith.constant 5.000000e-01 : f32
    %160 = vector.broadcast %cst_38 : f32 to vector<1x384xf32>
    %161 = arith.mulf %160, %159 : vector<1x384xf32>
    %162 = math.tanh %161 : vector<1x384xf32>
    %cst_39 = arith.constant 1.000000e+00 : f32
    %163 = vector.broadcast %cst_39 : f32 to vector<1x384xf32>
    %164 = arith.addf %162, %163 : vector<1x384xf32>
    %cst_40 = arith.constant 5.000000e-01 : f32
    %165 = vector.broadcast %cst_40 : f32 to vector<1x384xf32>
    %166 = arith.mulf %165, %164 : vector<1x384xf32>
    %167 = vector.extract_strided_slice %166 {offsets = [0, 0], sizes = [1, 128], strides = [1, 1]} : vector<1x384xf32> to vector<1x128xf32>
    %168 = vector.extract_strided_slice %166 {offsets = [0, 128], sizes = [1, 128], strides = [1, 1]} : vector<1x384xf32> to vector<1x128xf32>
    %169 = vector.extract_strided_slice %166 {offsets = [0, 256], sizes = [1, 128], strides = [1, 1]} : vector<1x384xf32> to vector<1x128xf32>
    %170 = vector.extract_strided_slice %158 {offsets = [0, 384], sizes = [1, 128], strides = [1, 1]} : vector<1x512xf32> to vector<1x128xf32>
    %171 = math.tanh %170 : vector<1x128xf32>
    %172 = arith.mulf %168, %153 : vector<1x128xf32>
    %173 = arith.mulf %167, %171 : vector<1x128xf32>
    %174 = arith.addf %172, %173 : vector<1x128xf32>
    %175 = math.tanh %174 : vector<1x128xf32>
    %176 = arith.mulf %169, %175 : vector<1x128xf32>
    %c0_41 = arith.constant 0 : index
    %c0_42 = arith.constant 0 : index
    %177 = vector.load %arg4[%c0_41, %c0_42] : memref<1x128xf32, #tpu.memory_space<vmem>>, vector<1x128xf32>
    %178 = arith.mulf %176, %177 : vector<1x128xf32>
    %cst_43 = arith.constant dense<0.000000e+00> : vector<1xf32>
    %179 = vector.multi_reduction <add>, %178, %cst_43 [1] : vector<1x128xf32> to vector<1xf32>
    %180 = vector.shape_cast %179 : vector<1xf32> to vector<1x1xf32>
    %c0_44 = arith.constant 0 : index
    %c0_45 = arith.constant 0 : index
    %181 = vector.load %arg5[%c0_44, %c0_45] : memref<1x1xf32, #tpu.memory_space<vmem>>, vector<1x1xf32>
    %182 = arith.addf %180, %181 : vector<1x1xf32>
    %c0_46 = arith.constant 0 : index
    %c0_47 = arith.constant 0 : index
    %183 = vector.load %arg6[%c0_46, %c0_47] : memref<1x1xf32, #tpu.memory_space<vmem>>, vector<1x1xf32>
    tpu.vector_store %arg6[%c0_46, %c0_47], %182 {strides = array<i32>} : memref<1x1xf32, #tpu.memory_space<vmem>>, vector<1x1xf32>,
    return
  }
}

</mosaic_0001>

<llo_original>
// kernel: lstm_forward_pallas.1
$region0: #{lstm_forward_pallas.1}
  #allocation0 [shape = 'u32[]', space=smem, size = 0x4, offset = 0x4, fixed_abs, tag = 'smem constant byte address 0x4 - core index']
  #allocation1 [shape = 'u32[144,128]{1,0:T(1,128)}', space=vmem, size = 0x12000, scoped, tag = 'internal scratch']
  #allocation2 [shape = 'f32[8,512]{1,0:T(8,128)}', space=vmem, size = 0x4000, scoped, tag = 'scratch operand']
  #allocation3 [shape = 'f32[1,1]{1,0:T(1,128)S(1)}', space=vmem, size = 0x200, scoped, tag = 'scoped memory for lstm_forward_pallas.1']
  %s0 = inlined_call_operand.vmem [shape: f32[8,8], index: 0, kind: input, shape index: {}]
  %s1 = inlined_call_operand.vmem [shape: f32[8,512], index: 1, kind: input, shape index: {}]
  %s2 = inlined_call_operand.vmem [shape: f32[128,512], index: 2, kind: input, shape index: {}]
  %s3 = inlined_call_operand.vmem [shape: f32[1,512], index: 3, kind: input, shape index: {}]
  %s4 = inlined_call_operand.vmem [shape: f32[1,128], index: 4, kind: input, shape index: {}]
  %s5 = inlined_call_operand.<no memory space> [shape: f32[1,1], index: 5, kind: input, shape index: {}]
  %s6 = inlined_call_operand.hbm [shape: f32[1,1], index: 6, kind: output, shape index: {}]
  %s7 = sld [smem:[#allocation0]]
  $region34: #{lstm_forward_pallas.1} parent=0
    _
  %s9 = ssub.s32 1, %s7
  %s10 = scalar_select 0, %s9, %s7
  %v11 = vstv %s5
  %12 = vst [vmem:[#allocation3] sm:$0x1] %v11
  $region1: #{lstm_forward_pallas.1} parent=0
    #allocation4 [shape = 'u8[512]{0}', space=vmem, size = 0x400, scoped, tag = 'output window, operand 0, single buffered']
    #allocation5 [shape = 's32[1]{0}', space=sflag, size = 0x4, scoped, tag = 'scoped memory for lstm_forward_pallas.1']
    %13 = vsyncpa [#allocation5], 0
    // Predicated region
    $region2: #{lstm_forward_pallas.1} parent=1 // pred_check
      _
    $region3: #{lstm_forward_pallas.1} parent=1 // pred_check_branch
      %15 = sbr.rel (0) target = $region5
    $region4: #{lstm_forward_pallas.1} parent=1 // pred_region
      _
    $region5: #{lstm_forward_pallas.1} parent=1 // pred_fallthru
      _
    // Predicated region
    $region6: #{lstm_forward_pallas.1} parent=1 // pred_check
      _
    $region7: #{lstm_forward_pallas.1} parent=1 // pred_check_branch
      %17 = sbr.rel (0) target = $region9
    $region8: #{lstm_forward_pallas.1} parent=1 // pred_region
      _
    $region9: #{lstm_forward_pallas.1} parent=1 // pred_fallthru
      _
    // Predicated region
    $region10: #{lstm_forward_pallas.1} parent=1 // pred_check
      _
    $region11: #{lstm_forward_pallas.1} parent=1 // pred_check_branch
      %19 = sbr.rel (0) target = $region13
    $region12: #{lstm_forward_pallas.1} parent=1 // pred_region
      _
    $region13: #{lstm_forward_pallas.1} parent=1 // pred_fallthru
      _
    // Predicated region
    $region14: #{lstm_forward_pallas.1} parent=1 // pred_check
      _
    $region15: #{lstm_forward_pallas.1} parent=1 // pred_check_branch
      %21 = sbr.rel (0) target = $region17
    $region16: #{lstm_forward_pallas.1} parent=1 // pred_region
      _
    $region17: #{lstm_forward_pallas.1} parent=1 // pred_fallthru
      _
    // Predicated region
    $region18: #{lstm_forward_pallas.1} parent=1 // pred_check
      _
    $region19: #{lstm_forward_pallas.1} parent=1 // pred_check_branch
      %23 = sbr.rel (0) target = $region21
    $region20: #{lstm_forward_pallas.1} parent=1 // pred_region
      _
    $region21: #{lstm_forward_pallas.1} parent=1 // pred_fallthru
      _
    // Predicated region
    $region22: #{lstm_forward_pallas.1} parent=1 // pred_check
      _
    $region23: #{lstm_forward_pallas.1} parent=1 // pred_check_branch
      %25 = sbr.rel (0) target = $region25
    $region24: #{lstm_forward_pallas.1} parent=1 // pred_region
      _
    $region25: #{lstm_forward_pallas.1} parent=1 // pred_fallthru
      _
    %v26 = vld [vmem:[%s0] sm:$0xff]
    %v27 = vld [vmem:[%s1] sm:$0xff]
    %v28 = vld [vmem:[%s1 + $0x8] sm:$0xff]
    %v29 = vld [vmem:[%s1 + $0x10] sm:$0xff]
    %v30 = vld [vmem:[%s1 + $0x18] sm:$0xff]
    %v31 = vld [vmem:[%s3] sm:$0xf]
    %v33 = vlaneseq
    %v34 = vshrl.u32 %v33, 7
    %v35 = vsub.s32 0, %v34
    %v36 = vrot.slane %v31, %v35
    %v37 = vlaneseq
    %v38 = vshrl.u32 %v37, 7
    %v39 = vsub.s32 1, %v38
    %v40 = vrot.slane %v31, %v39
    %v41 = vlaneseq
    %v42 = vshrl.u32 %v41, 7
    %v43 = vsub.s32 2, %v42
    %v44 = vrot.slane %v31, %v43
    %v45 = vlaneseq
    %v46 = vshrl.u32 %v45, 7
    %v47 = vsub.s32 3, %v46
    %v48 = vrot.slane %v31, %v47
    %vm53 = vcmask 64512
    %v55 = vsel %vm53, %v26, 0
    %57 = vmatprep.subr.mxu0 %v28
    %58 = vmatpush1.msra.mxu0 %v27
    %59 = vmatprep.subr.mxu0 0.0
    %60 = vmatpush1.msra.mxu0 0.0
    %61 = vmatprep.subr.mxu0 0.0
    %62 = vmatpush1.msra.mxu0 0.0
    %63 = vmatprep.subr.mxu0 0.0
    %64 = vmatpush1.msra.mxu0 0.0
    %65 = vmatprep.subr.mxu0 0.0
    %66 = vmatpush1.msra.mxu0 0.0
    %67 = vmatprep.subr.mxu0 0.0
    %68 = vmatpush1.msra.mxu0 0.0
    %69 = vmatprep.subr.mxu0 0.0
    %70 = vmatpush1.msra.mxu0 0.0
    %71 = vmatprep.subr.mxu0 0.0
    %72 = vmatpush1.msra.mxu0 0.0
    %73 = vmatprep.subr.mxu0 0.0
    %74 = vmatpush1.msra.mxu0 0.0
    %75 = vmatprep.subr.mxu0 0.0
    %76 = vmatpush1.msra.mxu0 0.0
    %77 = vmatprep.subr.mxu0 0.0
    %78 = vmatpush1.msra.mxu0 0.0
    %79 = vmatprep.subr.mxu0 0.0
    %80 = vmatpush1.msra.mxu0 0.0
    %81 = vmatprep.subr.mxu0 0.0
    %82 = vmatpush1.msra.mxu0 0.0
    %83 = vmatprep.subr.mxu0 0.0
    %84 = vmatpush1.msra.mxu0 0.0
    %85 = vmatprep.subr.mxu0 0.0
    %86 = vmatpush1.msra.mxu0 0.0
    %87 = vmatprep.subr.mxu0 0.0
    %88 = vmatpush1.msra.mxu0 0.0
    %89 = vmatprep.subr.mxu0 0.0
    %90 = vmatpush1.msra.mxu0 0.0
    %91 = vmatprep.subr.mxu0 0.0
    %92 = vmatpush1.msra.mxu0 0.0
    %93 = vmatprep.subr.mxu0 0.0
    %94 = vmatpush1.msra.mxu0 0.0
    %95 = vmatprep.subr.mxu0 0.0
    %96 = vmatpush1.msra.mxu0 0.0
    %97 = vmatprep.subr.mxu0 0.0
    %98 = vmatpush1.msra.mxu0 0.0
    %99 = vmatprep.subr.mxu0 0.0
    %100 = vmatpush1.msra.mxu0 0.0
    %101 = vmatprep.subr.mxu0 0.0
    %102 = vmatpush1.msra.mxu0 0.0
    %103 = vmatprep.subr.mxu0 0.0
    %104 = vmatpush1.msra.mxu0 0.0
    %105 = vmatprep.subr.mxu0 0.0
    %106 = vmatpush1.msra.mxu0 0.0
    %107 = vmatprep.subr.mxu0 0.0
    %108 = vmatpush1.msra.mxu0 0.0
    %109 = vmatprep.subr.mxu0 0.0
    %110 = vmatpush1.msra.mxu0 0.0
    %111 = vmatprep.subr.mxu0 0.0
    %112 = vmatpush1.msra.mxu0 0.0
    %113 = vmatprep.subr.mxu0 0.0
    %114 = vmatpush1.msra.mxu0 0.0
    %115 = vmatprep.subr.mxu0 0.0
    %116 = vmatpush1.msra.mxu0 0.0
    %117 = vmatprep.subr.mxu0 0.0
    %118 = vmatpush1.msra.mxu0 0.0
    %119 = vmatprep.subr.mxu0 0.0
    %120 = vmatpush1.msra.mxu0 0.0
    %121 = vmatprep.mubr.f32.mxu0 0.0
    %122 = vmatmul.mubr.f32.gmra.mrb[0].mxu0 %v55
    %v123 = vpop.f32.mrb[0].mxu0
    %v124 = vadd.f32 %v36, %v123
    %v125 = vpop.f32.mrb[0].mxu0
    %v126 = vadd.f32 %v40, %v125
    %127 = vdwg.mxu0
    %128 = vmatprep.subr.mxu0 %v30
    %129 = vmatpush1.msra.mxu0 %v29
    %130 = vmatprep.subr.mxu0 0.0
    %131 = vmatpush1.msra.mxu0 0.0
    %132 = vmatprep.subr.mxu0 0.0
    %133 = vmatpush1.msra.mxu0 0.0
    %134 = vmatprep.subr.mxu0 0.0
    %135 = vmatpush1.msra.mxu0 0.0
    %136 = vmatprep.subr.mxu0 0.0
    %137 = vmatpush1.msra.mxu0 0.0
    %138 = vmatprep.subr.mxu0 0.0
    %139 = vmatpush1.msra.mxu0 0.0
    %140 = vmatprep.subr.mxu0 0.0
    %141 = vmatpush1.msra.mxu0 0.0
    %142 = vmatprep.subr.mxu0 0.0
    %143 = vmatpush1.msra.mxu0 0.0
    %144 = vmatprep.subr.mxu0 0.0
    %145 = vmatpush1.msra.mxu0 0.0
    %146 = vmatprep.subr.mxu0 0.0
    %147 = vmatpush1.msra.mxu0 0.0
    %148 = vmatprep.subr.mxu0 0.0
    %149 = vmatpush1.msra.mxu0 0.0
    %150 = vmatprep.subr.mxu0 0.0
    %151 = vmatpush1.msra.mxu0 0.0
    %152 = vmatprep.subr.mxu0 0.0
    %153 = vmatpush1.msra.mxu0 0.0
    %154 = vmatprep.subr.mxu0 0.0
    %155 = vmatpush1.msra.mxu0 0.0
    %156 = vmatprep.subr.mxu0 0.0
    %157 = vmatpush1.msra.mxu0 0.0
    %158 = vmatprep.subr.mxu0 0.0
    %159 = vmatpush1.msra.mxu0 0.0
    %160 = vmatprep.subr.mxu0 0.0
    %161 = vmatpush1.msra.mxu0 0.0
    %162 = vmatprep.subr.mxu0 0.0
    %163 = vmatpush1.msra.mxu0 0.0
    %164 = vmatprep.subr.mxu0 0.0
    %165 = vmatpush1.msra.mxu0 0.0
    %166 = vmatprep.subr.mxu0 0.0
    %167 = vmatpush1.msra.mxu0 0.0
    %168 = vmatprep.subr.mxu0 0.0
    %169 = vmatpush1.msra.mxu0 0.0
    %170 = vmatprep.subr.mxu0 0.0
    %171 = vmatpush1.msra.mxu0 0.0
    %172 = vmatprep.subr.mxu0 0.0
    %173 = vmatpush1.msra.mxu0 0.0
    %174 = vmatprep.subr.mxu0 0.0
    %175 = vmatpush1.msra.mxu0 0.0
    %176 = vmatprep.subr.mxu0 0.0
    %177 = vmatpush1.msra.mxu0 0.0
    %178 = vmatprep.subr.mxu0 0.0
    %179 = vmatpush1.msra.mxu0 0.0
    %180 = vmatprep.subr.mxu0 0.0
    %181 = vmatpush1.msra.mxu0 0.0
    %182 = vmatprep.subr.mxu0 0.0
    %183 = vmatpush1.msra.mxu0 0.0
    %184 = vmatprep.subr.mxu0 0.0
    %185 = vmatpush1.msra.mxu0 0.0
    %186 = vmatprep.subr.mxu0 0.0
    %187 = vmatpush1.msra.mxu0 0.0
    %188 = vmatprep.subr.mxu0 0.0
    %189 = vmatpush1.msra.mxu0 0.0
    %190 = vmatprep.subr.mxu0 0.0
    %191 = vmatpush1.msra.mxu0 0.0
    %192 = vmatprep.mubr.f32.mxu0 0.0
    %193 = vmatmul.mubr.f32.gmra.mrb[0].mxu0 %v55
    %v194 = vpop.f32.mrb[0].mxu0
    %v195 = vadd.f32 %v44, %v194
    %v196 = vpop.f32.mrb[0].mxu0
    %v197 = vadd.f32 %v48, %v196
    %198 = vdwg.mxu0
    %v199 = vld [vmem:[%s2] sm:$0xff]
    %v200 = vld [vmem:[%s2 + $0x8] sm:$0xff]
    %v201 = vld [vmem:[%s2 + $0x10] sm:$0xff]
    %v202 = vld [vmem:[%s2 + $0x18] sm:$0xff]
    %v203 = vld [vmem:[%s2 + $0x20] sm:$0xff]
    %v204 = vld [vmem:[%s2 + $0x28] sm:$0xff]
    %v205 = vld [vmem:[%s2 + $0x30] sm:$0xff]
    %v206 = vld [vmem:[%s2 + $0x38] sm:$0xff]
    %v207 = vld [vmem:[%s2 + $0x40] sm:$0xff]
    %v208 = vld [vmem:[%s2 + $0x48] sm:$0xff]
    %v209 = vld [vmem:[%s2 + $0x50] sm:$0xff]
    %v210 = vld [vmem:[%s2 + $0x58] sm:$0xff]
    %v211 = vld [vmem:[%s2 + $0x60] sm:$0xff]
    %v212 = vld [vmem:[%s2 + $0x68] sm:$0xff]
    %v213 = vld [vmem:[%s2 + $0x70] sm:$0xff]
    %v214 = vld [vmem:[%s2 + $0x78] sm:$0xff]
    %v215 = vld [vmem:[%s2 + $0x80] sm:$0xff]
    %v216 = vld [vmem:[%s2 + $0x88] sm:$0xff]
    %v217 = vld [vmem:[%s2 + $0x90] sm:$0xff]
    %v218 = vld [vmem:[%s2 + $0x98] sm:$0xff]
    %v219 = vld [vmem:[%s2 + $0xa0] sm:$0xff]
    %v220 = vld [vmem:[%s2 + $0xa8] sm:$0xff]
    %v221 = vld [vmem:[%s2 + $0xb0] sm:$0xff]
    %v222 = vld [vmem:[%s2 + $0xb8] sm:$0xff]
    %v223 = vld [vmem:[%s2 + $0xc0] sm:$0xff]
    %v224 = vld [vmem:[%s2 + $0xc8] sm:$0xff]
    %v225 = vld [vmem:[%s2 + $0xd0] sm:$0xff]
    %v226 = vld [vmem:[%s2 + $0xd8] sm:$0xff]
    %v227 = vld [vmem:[%s2 + $0xe0] sm:$0xff]
    %v228 = vld [vmem:[%s2 + $0xe8] sm:$0xff]
    %v229 = vld [vmem:[%s2 + $0xf0] sm:$0xff]
    %v230 = vld [vmem:[%s2 + $0xf8] sm:$0xff]
    %v231 = vld [vmem:[%s2 + $0x100] sm:$0xff]
    %v232 = vld [vmem:[%s2 + $0x108] sm:$0xff]
    %v233 = vld [vmem:[%s2 + $0x110] sm:$0xff]
    %v234 = vld [vmem:[%s2 + $0x118] sm:$0xff]
    %v235 = vld [vmem:[%s2 + $0x120] sm:$0xff]
    %v236 = vld [vmem:[%s2 + $0x128] sm:$0xff]
    %v237 = vld [vmem:[%s2 + $0x130] sm:$0xff]
    %v238 = vld [vmem:[%s2 + $0x138] sm:$0xff]
    %v239 = vld [vmem:[%s2 + $0x140] sm:$0xff]
    %v240 = vld [vmem:[%s2 + $0x148] sm:$0xff]
    %v241 = vld [vmem:[%s2 + $0x150] sm:$0xff]
    %v242 = vld [vmem:[%s2 + $0x158] sm:$0xff]
    %v243 = vld [vmem:[%s2 + $0x160] sm:$0xff]
    %v244 = vld [vmem:[%s2 + $0x168] sm:$0xff]
    %v245 = vld [vmem:[%s2 + $0x170] sm:$0xff]
    %v246 = vld [vmem:[%s2 + $0x178] sm:$0xff]
    %v247 = vld [vmem:[%s2 + $0x180] sm:$0xff]
    %v248 = vld [vmem:[%s2 + $0x188] sm:$0xff]
    %v249 = vld [vmem:[%s2 + $0x190] sm:$0xff]
    %v250 = vld [vmem:[%s2 + $0x198] sm:$0xff]
    %v251 = vld [vmem:[%s2 + $0x1a0] sm:$0xff]
    %v252 = vld [vmem:[%s2 + $0x1a8] sm:$0xff]
    %v253 = vld [vmem:[%s2 + $0x1b0] sm:$0xff]
    %v254 = vld [vmem:[%s2 + $0x1b8] sm:$0xff]
    %v255 = vld [vmem:[%s2 + $0x1c0] sm:$0xff]
    %v256 = vld [vmem:[%s2 + $0x1c8] sm:$0xff]
    %v257 = vld [vmem:[%s2 + $0x1d0] sm:$0xff]
    %v258 = vld [vmem:[%s2 + $0x1d8] sm:$0xff]
    %v259 = vld [vmem:[%s2 + $0x1e0] sm:$0xff]
    %v260 = vld [vmem:[%s2 + $0x1e8] sm:$0xff]
    %v261 = vld [vmem:[%s2 + $0x1f0] sm:$0xff]
    %v262 = vld [vmem:[%s2 + $0x1f8] sm:$0xff]
    %263 = vmatprep.subr.mxu0 %v200
    %264 = vmatpush1.msra.mxu0 %v199
    %265 = vmatprep.subr.mxu0 %v204
    %266 = vmatpush1.msra.mxu0 %v203
    %267 = vmatprep.subr.mxu0 %v208
    %268 = vmatpush1.msra.mxu0 %v207
    %269 = vmatprep.subr.mxu0 %v212
    %270 = vmatpush1.msra.mxu0 %v211
    %271 = vmatprep.subr.mxu0 %v216
    %272 = vmatpush1.msra.mxu0 %v215
    %273 = vmatprep.subr.mxu0 %v220
    %274 = vmatpush1.msra.mxu0 %v219
    %275 = vmatprep.subr.mxu0 %v224
    %276 = vmatpush1.msra.mxu0 %v223
    %277 = vmatprep.subr.mxu0 %v228
    %278 = vmatpush1.msra.mxu0 %v227
    %279 = vmatprep.subr.mxu0 %v232
    %280 = vmatpush1.msra.mxu0 %v231
    %281 = vmatprep.subr.mxu0 %v236
    %282 = vmatpush1.msra.mxu0 %v235
    %283 = vmatprep.subr.mxu0 %v240
    %284 = vmatpush1.msra.mxu0 %v239
    %285 = vmatprep.subr.mxu0 %v244
    %286 = vmatpush1.msra.mxu0 %v243
    %287 = vmatprep.subr.mxu0 %v248
    %288 = vmatpush1.msra.mxu0 %v247
    %289 = vmatprep.subr.mxu0 %v252
    %290 = vmatpush1.msra.mxu0 %v251
    %291 = vmatprep.subr.mxu0 %v256
    %292 = vmatpush1.msra.mxu0 %v255
    %293 = vmatprep.subr.mxu0 %v260
    %294 = vmatpush1.msra.mxu0 %v259
    %295 = vmatprep.subr.mxu0 0.0
    %296 = vmatpush1.msra.mxu0 0.0
    %297 = vmatprep.subr.mxu0 0.0
    %298 = vmatpush1.msra.mxu0 0.0
    %299 = vmatprep.subr.mxu0 0.0
    %300 = vmatpush1.msra.mxu0 0.0
    %301 = vmatprep.subr.mxu0 0.0
    %302 = vmatpush1.msra.mxu0 0.0
    %303 = vmatprep.subr.mxu0 0.0
    %304 = vmatpush1.msra.mxu0 0.0
    %305 = vmatprep.subr.mxu0 0.0
    %306 = vmatpush1.msra.mxu0 0.0
    %307 = vmatprep.subr.mxu0 0.0
    %308 = vmatpush1.msra.mxu0 0.0
    %309 = vmatprep.subr.mxu0 0.0
    %310 = vmatpush1.msra.mxu0 0.0
    %311 = vmatprep.subr.mxu0 0.0
    %312 = vmatpush1.msra.mxu0 0.0
    %313 = vmatprep.subr.mxu0 0.0
    %314 = vmatpush1.msra.mxu0 0.0
    %315 = vmatprep.subr.mxu0 0.0
    %316 = vmatpush1.msra.mxu0 0.0
    %317 = vmatprep.subr.mxu0 0.0
    %318 = vmatpush1.msra.mxu0 0.0
    %319 = vmatprep.subr.mxu0 0.0
    %320 = vmatpush1.msra.mxu0 0.0
    %321 = vmatprep.subr.mxu0 0.0
    %322 = vmatpush1.msra.mxu0 0.0
    %323 = vmatprep.subr.mxu0 0.0
    %324 = vmatpush1.msra.mxu0 0.0
    %325 = vmatprep.subr.mxu0 0.0
    %326 = vmatpush1.msra.mxu0 0.0
    %327 = vmatprep.mubr.f32.mxu0 0.0
    %328 = vmatmul.mubr.f32.gmra.mrb[0].mxu0 0.0
    %v329 = vpop.f32.mrb[0].mxu0
    %v330 = vadd.f32 0.0, %v329
    %v331 = vpop.f32.mrb[0].mxu0
    %v332 = vadd.f32 0.0, %v331
    %333 = vdwg.mxu0
    %334 = vmatprep.subr.mxu0 %v202
    %335 = vmatpush1.msra.mxu0 %v201
    %336 = vmatprep.subr.mxu0 %v206
    %337 = vmatpush1.msra.mxu0 %v205
    %338 = vmatprep.subr.mxu0 %v210
    %339 = vmatpush1.msra.mxu0 %v209
    %340 = vmatprep.subr.mxu0 %v214
    %341 = vmatpush1.msra.mxu0 %v213
    %342 = vmatprep.subr.mxu0 %v218
    %343 = vmatpush1.msra.mxu0 %v217
    %344 = vmatprep.subr.mxu0 %v222
    %345 = vmatpush1.msra.mxu0 %v221
    %346 = vmatprep.subr.mxu0 %v226
    %347 = vmatpush1.msra.mxu0 %v225
    %348 = vmatprep.subr.mxu0 %v230
    %349 = vmatpush1.msra.mxu0 %v229
    %350 = vmatprep.subr.mxu0 %v234
    %351 = vmatpush1.msra.mxu0 %v233
    %352 = vmatprep.subr.mxu0 %v238
    %353 = vmatpush1.msra.mxu0 %v237
    %354 = vmatprep.subr.mxu0 %v242
    %355 = vmatpush1.msra.mxu0 %v241
    %356 = vmatprep.subr.mxu0 %v246
    %357 = vmatpush1.msra.mxu0 %v245
    %358 = vmatprep.subr.mxu0 %v250
    %359 = vmatpush1.msra.mxu0 %v249
    %360 = vmatprep.subr.mxu0 %v254
    %361 = vmatpush1.msra.mxu0 %v253
    %362 = vmatprep.subr.mxu0 %v258
    %363 = vmatpush1.msra.mxu0 %v257
    %364 = vmatprep.subr.mxu0 %v262
    %365 = vmatpush1.msra.mxu0 %v261
    %366 = vmatprep.subr.mxu0 0.0
    %367 = vmatpush1.msra.mxu0 0.0
    %368 = vmatprep.subr.mxu0 0.0
    %369 = vmatpush1.msra.mxu0 0.0
    %370 = vmatprep.subr.mxu0 0.0
    %371 = vmatpush1.msra.mxu0 0.0
    %372 = vmatprep.subr.mxu0 0.0
    %373 = vmatpush1.msra.mxu0 0.0
    %374 = vmatprep.subr.mxu0 0.0
    %375 = vmatpush1.msra.mxu0 0.0
    %376 = vmatprep.subr.mxu0 0.0
    %377 = vmatpush1.msra.mxu0 0.0
    %378 = vmatprep.subr.mxu0 0.0
    %379 = vmatpush1.msra.mxu0 0.0
    %380 = vmatprep.subr.mxu0 0.0
    %381 = vmatpush1.msra.mxu0 0.0
    %382 = vmatprep.subr.mxu0 0.0
    %383 = vmatpush1.msra.mxu0 0.0
    %384 = vmatprep.subr.mxu0 0.0
    %385 = vmatpush1.msra.mxu0 0.0
    %386 = vmatprep.subr.mxu0 0.0
    %387 = vmatpush1.msra.mxu0 0.0
    %388 = vmatprep.subr.mxu0 0.0
    %389 = vmatpush1.msra.mxu0 0.0
    %390 = vmatprep.subr.mxu0 0.0
    %391 = vmatpush1.msra.mxu0 0.0
    %392 = vmatprep.subr.mxu0 0.0
    %393 = vmatpush1.msra.mxu0 0.0
    %394 = vmatprep.subr.mxu0 0.0
    %395 = vmatpush1.msra.mxu0 0.0
    %396 = vmatprep.subr.mxu0 0.0
    %397 = vmatpush1.msra.mxu0 0.0
    %398 = vmatprep.mubr.f32.mxu0 0.0
    %399 = vmatmul.mubr.f32.gmra.mrb[0].mxu0 0.0
    %v400 = vpop.f32.mrb[0].mxu0
    %v401 = vadd.f32 0.0, %v400
    %v402 = vpop.f32.mrb[0].mxu0
    %v403 = vadd.f32 0.0, %v402
    %404 = vdwg.mxu0
    %v405 = vadd.f32 %v124, %v330
    %v406 = vadd.f32 %v126, %v332
    %v407 = vadd.f32 %v195, %v401
    %v408 = vadd.f32 %v197, %v403
    %v409 = vmul.f32 %v405, 0.5
    %v410 = vmul.f32 %v406, 0.5
    %v411 = vmul.f32 %v407, 0.5
    %v412 = vtanh.pop %v409
    %v413 = vtanh.pop %v410
    %v414 = vtanh.pop %v411
    %v415 = vadd.f32 %v412, 1.0
    %v416 = vadd.f32 %v413, 1.0
    %v417 = vadd.f32 %v414, 1.0
    %v418 = vmul.f32 %v415, 0.5
    %v419 = vmul.f32 %v416, 0.5
    %v420 = vmul.f32 %v417, 0.5
    %v421 = vtanh.pop %v408
    %v422 = vmul.f32 %v419, 0.0
    %v423 = vmul.f32 %v418, %v421
    %v424 = vadd.f32 %v422, %v423
    %v425 = vtanh.pop %v424
    %v426 = vmul.f32 %v420, %v425
    %427 = vmatprep.subr.mxu0 %v200
    %428 = vmatpush1.msra.mxu0 %v199
    %429 = vmatprep.subr.mxu0 %v204
    %430 = vmatpush1.msra.mxu0 %v203
    %431 = vmatprep.subr.mxu0 %v208
    %432 = vmatpush1.msra.mxu0 %v207
    %433 = vmatprep.subr.mxu0 %v212
    %434 = vmatpush1.msra.mxu0 %v211
    %435 = vmatprep.subr.mxu0 %v216
    %436 = vmatpush1.msra.mxu0 %v215
    %437 = vmatprep.subr.mxu0 %v220
    %438 = vmatpush1.msra.mxu0 %v219
    %439 = vmatprep.subr.mxu0 %v224
    %440 = vmatpush1.msra.mxu0 %v223
    %441 = vmatprep.subr.mxu0 %v228
    %442 = vmatpush1.msra.mxu0 %v227
    %443 = vmatprep.subr.mxu0 %v232
    %444 = vmatpush1.msra.mxu0 %v231
    %445 = vmatprep.subr.mxu0 %v236
    %446 = vmatpush1.msra.mxu0 %v235
    %447 = vmatprep.subr.mxu0 %v240
    %448 = vmatpush1.msra.mxu0 %v239
    %449 = vmatprep.subr.mxu0 %v244
    %450 = vmatpush1.msra.mxu0 %v243
    %451 = vmatprep.subr.mxu0 %v248
    %452 = vmatpush1.msra.mxu0 %v247
    %453 = vmatprep.subr.mxu0 %v252
    %454 = vmatpush1.msra.mxu0 %v251
    %455 = vmatprep.subr.mxu0 %v256
    %456 = vmatpush1.msra.mxu0 %v255
    %457 = vmatprep.subr.mxu0 %v260
    %458 = vmatpush1.msra.mxu0 %v259
    %459 = vmatprep.subr.mxu0 0.0
    %460 = vmatpush1.msra.mxu0 0.0
    %461 = vmatprep.subr.mxu0 0.0
    %462 = vmatpush1.msra.mxu0 0.0
    %463 = vmatprep.subr.mxu0 0.0
    %464 = vmatpush1.msra.mxu0 0.0
    %465 = vmatprep.subr.mxu0 0.0
    %466 = vmatpush1.msra.mxu0 0.0
    %467 = vmatprep.subr.mxu0 0.0
    %468 = vmatpush1.msra.mxu0 0.0
    %469 = vmatprep.subr.mxu0 0.0
    %470 = vmatpush1.msra.mxu0 0.0
    %471 = vmatprep.subr.mxu0 0.0
    %472 = vmatpush1.msra.mxu0 0.0
    %473 = vmatprep.subr.mxu0 0.0
    %474 = vmatpush1.msra.mxu0 0.0
    %475 = vmatprep.subr.mxu0 0.0
    %476 = vmatpush1.msra.mxu0 0.0
    %477 = vmatprep.subr.mxu0 0.0
    %478 = vmatpush1.msra.mxu0 0.0
    %479 = vmatprep.subr.mxu0 0.0
    %480 = vmatpush1.msra.mxu0 0.0
    %481 = vmatprep.subr.mxu0 0.0
    %482 = vmatpush1.msra.mxu0 0.0
    %483 = vmatprep.subr.mxu0 0.0
    %484 = vmatpush1.msra.mxu0 0.0
    %485 = vmatprep.subr.mxu0 0.0
    %486 = vmatpush1.msra.mxu0 0.0
    %487 = vmatprep.subr.mxu0 0.0
    %488 = vmatpush1.msra.mxu0 0.0
    %489 = vmatprep.subr.mxu0 0.0
    %490 = vmatpush1.msra.mxu0 0.0
    %491 = vmatprep.mubr.f32.mxu0 0.0
    %492 = vmatmul.mubr.f32.gmra.mrb[0].mxu0 %v426
    %v493 = vpop.f32.mrb[0].mxu0
    %v494 = vadd.f32 0.0, %v493
    %v495 = vpop.f32.mrb[0].mxu0
    %v496 = vadd.f32 0.0, %v495
    %497 = vdwg.mxu0
    %498 = vmatprep.subr.mxu0 %v202
    %499 = vmatpush1.msra.mxu0 %v201
    %500 = vmatprep.subr.mxu0 %v206
    %501 = vmatpush1.msra.mxu0 %v205
    %502 = vmatprep.subr.mxu0 %v210
    %503 = vmatpush1.msra.mxu0 %v209
    %504 = vmatprep.subr.mxu0 %v214
    %505 = vmatpush1.msra.mxu0 %v213
    %506 = vmatprep.subr.mxu0 %v218
    %507 = vmatpush1.msra.mxu0 %v217
    %508 = vmatprep.subr.mxu0 %v222
    %509 = vmatpush1.msra.mxu0 %v221
    %510 = vmatprep.subr.mxu0 %v226
    %511 = vmatpush1.msra.mxu0 %v225
    %512 = vmatprep.subr.mxu0 %v230
    %513 = vmatpush1.msra.mxu0 %v229
    %514 = vmatprep.subr.mxu0 %v234
    %515 = vmatpush1.msra.mxu0 %v233
    %516 = vmatprep.subr.mxu0 %v238
    %517 = vmatpush1.msra.mxu0 %v237
    %518 = vmatprep.subr.mxu0 %v242
    %519 = vmatpush1.msra.mxu0 %v241
    %520 = vmatprep.subr.mxu0 %v246
    %521 = vmatpush1.msra.mxu0 %v245
    %522 = vmatprep.subr.mxu0 %v250
    %523 = vmatpush1.msra.mxu0 %v249
    %524 = vmatprep.subr.mxu0 %v254
    %525 = vmatpush1.msra.mxu0 %v253
    %526 = vmatprep.subr.mxu0 %v258
    %527 = vmatpush1.msra.mxu0 %v257
    %528 = vmatprep.subr.mxu0 %v262
    %529 = vmatpush1.msra.mxu0 %v261
    %530 = vmatprep.subr.mxu0 0.0
    %531 = vmatpush1.msra.mxu0 0.0
    %532 = vmatprep.subr.mxu0 0.0
    %533 = vmatpush1.msra.mxu0 0.0
    %534 = vmatprep.subr.mxu0 0.0
    %535 = vmatpush1.msra.mxu0 0.0
    %536 = vmatprep.subr.mxu0 0.0
    %537 = vmatpush1.msra.mxu0 0.0
    %538 = vmatprep.subr.mxu0 0.0
    %539 = vmatpush1.msra.mxu0 0.0
    %540 = vmatprep.subr.mxu0 0.0
    %541 = vmatpush1.msra.mxu0 0.0
    %542 = vmatprep.subr.mxu0 0.0
    %543 = vmatpush1.msra.mxu0 0.0
    %544 = vmatprep.subr.mxu0 0.0
    %545 = vmatpush1.msra.mxu0 0.0
    %546 = vmatprep.subr.mxu0 0.0
    %547 = vmatpush1.msra.mxu0 0.0
    %548 = vmatprep.subr.mxu0 0.0
    %549 = vmatpush1.msra.mxu0 0.0
    %550 = vmatprep.subr.mxu0 0.0
    %551 = vmatpush1.msra.mxu0 0.0
    %552 = vmatprep.subr.mxu0 0.0
    %553 = vmatpush1.msra.mxu0 0.0
    %554 = vmatprep.subr.mxu0 0.0
    %555 = vmatpush1.msra.mxu0 0.0
    %556 = vmatprep.subr.mxu0 0.0
    %557 = vmatpush1.msra.mxu0 0.0
    %558 = vmatprep.subr.mxu0 0.0
    %559 = vmatpush1.msra.mxu0 0.0
    %560 = vmatprep.subr.mxu0 0.0
    %561 = vmatpush1.msra.mxu0 0.0
    %562 = vmatprep.mubr.f32.mxu0 0.0
    %563 = vmatmul.mubr.f32.gmra.mrb[0].mxu0 %v426
    %v564 = vpop.f32.mrb[0].mxu0
    %v565 = vadd.f32 0.0, %v564
    %v566 = vpop.f32.mrb[0].mxu0
    %v567 = vadd.f32 0.0, %v566
    %568 = vdwg.mxu0
    %v573 = vrot.slane %v494, 7
    %v574 = vrot.slane %v496, 7
    %v575 = vrot.slane %v565, 7
    %v576 = vrot.slane %v567, 7
    %v581 = vadd.f32 %v124, %v573
    %v582 = vadd.f32 %v126, %v574
    %v583 = vadd.f32 %v195, %v575
    %v584 = vadd.f32 %v197, %v576
    %v585 = vmul.f32 %v581, 0.5
    %v586 = vmul.f32 %v582, 0.5
    %v587 = vmul.f32 %v583, 0.5
    %v588 = vtanh.pop %v585
    %v589 = vtanh.pop %v586
    %v590 = vtanh.pop %v587
    %v591 = vadd.f32 %v588, 1.0
    %v592 = vadd.f32 %v589, 1.0
    %v593 = vadd.f32 %v590, 1.0
    %v594 = vmul.f32 %v591, 0.5
    %v595 = vmul.f32 %v592, 0.5
    %v596 = vmul.f32 %v593, 0.5
    %v597 = vtanh.pop %v584
    %v599 = vrot.slane %v424, 7
    %v601 = vmul.f32 %v595, %v599
    %v602 = vmul.f32 %v594, %v597
    %v603 = vadd.f32 %v601, %v602
    %v604 = vtanh.pop %v603
    %v605 = vmul.f32 %v596, %v604
    %v607 = vrot.slane %v605, 1
    %609 = vmatprep.subr.mxu0 %v200
    %610 = vmatpush1.msra.mxu0 %v199
    %611 = vmatprep.subr.mxu0 %v204
    %612 = vmatpush1.msra.mxu0 %v203
    %613 = vmatprep.subr.mxu0 %v208
    %614 = vmatpush1.msra.mxu0 %v207
    %615 = vmatprep.subr.mxu0 %v212
    %616 = vmatpush1.msra.mxu0 %v211
    %617 = vmatprep.subr.mxu0 %v216
    %618 = vmatpush1.msra.mxu0 %v215
    %619 = vmatprep.subr.mxu0 %v220
    %620 = vmatpush1.msra.mxu0 %v219
    %621 = vmatprep.subr.mxu0 %v224
    %622 = vmatpush1.msra.mxu0 %v223
    %623 = vmatprep.subr.mxu0 %v228
    %624 = vmatpush1.msra.mxu0 %v227
    %625 = vmatprep.subr.mxu0 %v232
    %626 = vmatpush1.msra.mxu0 %v231
    %627 = vmatprep.subr.mxu0 %v236
    %628 = vmatpush1.msra.mxu0 %v235
    %629 = vmatprep.subr.mxu0 %v240
    %630 = vmatpush1.msra.mxu0 %v239
    %631 = vmatprep.subr.mxu0 %v244
    %632 = vmatpush1.msra.mxu0 %v243
    %633 = vmatprep.subr.mxu0 %v248
    %634 = vmatpush1.msra.mxu0 %v247
    %635 = vmatprep.subr.mxu0 %v252
    %636 = vmatpush1.msra.mxu0 %v251
    %637 = vmatprep.subr.mxu0 %v256
    %638 = vmatpush1.msra.mxu0 %v255
    %639 = vmatprep.subr.mxu0 %v260
    %640 = vmatpush1.msra.mxu0 %v259
    %641 = vmatprep.subr.mxu0 0.0
    %642 = vmatpush1.msra.mxu0 0.0
    %643 = vmatprep.subr.mxu0 0.0
    %644 = vmatpush1.msra.mxu0 0.0
    %645 = vmatprep.subr.mxu0 0.0
    %646 = vmatpush1.msra.mxu0 0.0
    %647 = vmatprep.subr.mxu0 0.0
    %648 = vmatpush1.msra.mxu0 0.0
    %649 = vmatprep.subr.mxu0 0.0
    %650 = vmatpush1.msra.mxu0 0.0
    %651 = vmatprep.subr.mxu0 0.0
    %652 = vmatpush1.msra.mxu0 0.0
    %653 = vmatprep.subr.mxu0 0.0
    %654 = vmatpush1.msra.mxu0 0.0
    %655 = vmatprep.subr.mxu0 0.0
    %656 = vmatpush1.msra.mxu0 0.0
    %657 = vmatprep.subr.mxu0 0.0
    %658 = vmatpush1.msra.mxu0 0.0
    %659 = vmatprep.subr.mxu0 0.0
    %660 = vmatpush1.msra.mxu0 0.0
    %661 = vmatprep.subr.mxu0 0.0
    %662 = vmatpush1.msra.mxu0 0.0
    %663 = vmatprep.subr.mxu0 0.0
    %664 = vmatpush1.msra.mxu0 0.0
    %665 = vmatprep.subr.mxu0 0.0
    %666 = vmatpush1.msra.mxu0 0.0
    %667 = vmatprep.subr.mxu0 0.0
    %668 = vmatpush1.msra.mxu0 0.0
    %669 = vmatprep.subr.mxu0 0.0
    %670 = vmatpush1.msra.mxu0 0.0
    %671 = vmatprep.subr.mxu0 0.0
    %672 = vmatpush1.msra.mxu0 0.0
    %673 = vmatprep.mubr.f32.mxu0 0.0
    %674 = vmatmul.mubr.f32.gmra.mrb[0].mxu0 %v607
    %v675 = vpop.f32.mrb[0].mxu0
    %v676 = vadd.f32 0.0, %v675
    %v677 = vpop.f32.mrb[0].mxu0
    %v678 = vadd.f32 0.0, %v677
    %679 = vdwg.mxu0
    %680 = vmatprep.subr.mxu0 %v202
    %681 = vmatpush1.msra.mxu0 %v201
    %682 = vmatprep.subr.mxu0 %v206
    %683 = vmatpush1.msra.mxu0 %v205
    %684 = vmatprep.subr.mxu0 %v210
    %685 = vmatpush1.msra.mxu0 %v209
    %686 = vmatprep.subr.mxu0 %v214
    %687 = vmatpush1.msra.mxu0 %v213
    %688 = vmatprep.subr.mxu0 %v218
    %689 = vmatpush1.msra.mxu0 %v217
    %690 = vmatprep.subr.mxu0 %v222
    %691 = vmatpush1.msra.mxu0 %v221
    %692 = vmatprep.subr.mxu0 %v226
    %693 = vmatpush1.msra.mxu0 %v225
    %694 = vmatprep.subr.mxu0 %v230
    %695 = vmatpush1.msra.mxu0 %v229
    %696 = vmatprep.subr.mxu0 %v234
    %697 = vmatpush1.msra.mxu0 %v233
    %698 = vmatprep.subr.mxu0 %v238
    %699 = vmatpush1.msra.mxu0 %v237
    %700 = vmatprep.subr.mxu0 %v242
    %701 = vmatpush1.msra.mxu0 %v241
    %702 = vmatprep.subr.mxu0 %v246
    %703 = vmatpush1.msra.mxu0 %v245
    %704 = vmatprep.subr.mxu0 %v250
    %705 = vmatpush1.msra.mxu0 %v249
    %706 = vmatprep.subr.mxu0 %v254
    %707 = vmatpush1.msra.mxu0 %v253
    %708 = vmatprep.subr.mxu0 %v258
    %709 = vmatpush1.msra.mxu0 %v257
    %710 = vmatprep.subr.mxu0 %v262
    %711 = vmatpush1.msra.mxu0 %v261
    %712 = vmatprep.subr.mxu0 0.0
    %713 = vmatpush1.msra.mxu0 0.0
    %714 = vmatprep.subr.mxu0 0.0
    %715 = vmatpush1.msra.mxu0 0.0
    %716 = vmatprep.subr.mxu0 0.0
    %717 = vmatpush1.msra.mxu0 0.0
    %718 = vmatprep.subr.mxu0 0.0
    %719 = vmatpush1.msra.mxu0 0.0
    %720 = vmatprep.subr.mxu0 0.0
    %721 = vmatpush1.msra.mxu0 0.0
    %722 = vmatprep.subr.mxu0 0.0
    %723 = vmatpush1.msra.mxu0 0.0
    %724 = vmatprep.subr.mxu0 0.0
    %725 = vmatpush1.msra.mxu0 0.0
    %726 = vmatprep.subr.mxu0 0.0
    %727 = vmatpush1.msra.mxu0 0.0
    %728 = vmatprep.subr.mxu0 0.0
    %729 = vmatpush1.msra.mxu0 0.0
    %730 = vmatprep.subr.mxu0 0.0
    %731 = vmatpush1.msra.mxu0 0.0
    %732 = vmatprep.subr.mxu0 0.0
    %733 = vmatpush1.msra.mxu0 0.0
    %734 = vmatprep.subr.mxu0 0.0
    %735 = vmatpush1.msra.mxu0 0.0
    %736 = vmatprep.subr.mxu0 0.0
    %737 = vmatpush1.msra.mxu0 0.0
    %738 = vmatprep.subr.mxu0 0.0
    %739 = vmatpush1.msra.mxu0 0.0
    %740 = vmatprep.subr.mxu0 0.0
    %741 = vmatpush1.msra.mxu0 0.0
    %742 = vmatprep.subr.mxu0 0.0
    %743 = vmatpush1.msra.mxu0 0.0
    %744 = vmatprep.mubr.f32.mxu0 0.0
    %745 = vmatmul.mubr.f32.gmra.mrb[0].mxu0 %v607
    %v746 = vpop.f32.mrb[0].mxu0
    %v747 = vadd.f32 0.0, %v746
    %v748 = vpop.f32.mrb[0].mxu0
    %v749 = vadd.f32 0.0, %v748
    %750 = vdwg.mxu0
    %v755 = vrot.slane %v676, 6
    %v756 = vrot.slane %v678, 6
    %v757 = vrot.slane %v747, 6
    %v758 = vrot.slane %v749, 6
    %v763 = vadd.f32 %v124, %v755
    %v764 = vadd.f32 %v126, %v756
    %v765 = vadd.f32 %v195, %v757
    %v766 = vadd.f32 %v197, %v758
    %v767 = vmul.f32 %v763, 0.5
    %v768 = vmul.f32 %v764, 0.5
    %v769 = vmul.f32 %v765, 0.5
    %v770 = vtanh.pop %v767
    %v771 = vtanh.pop %v768
    %v772 = vtanh.pop %v769
    %v773 = vadd.f32 %v770, 1.0
    %v774 = vadd.f32 %v771, 1.0
    %v775 = vadd.f32 %v772, 1.0
    %v776 = vmul.f32 %v773, 0.5
    %v777 = vmul.f32 %v774, 0.5
    %v778 = vmul.f32 %v775, 0.5
    %v779 = vtanh.pop %v766
    %v781 = vrot.slane %v603, 7
    %v783 = vmul.f32 %v777, %v781
    %v784 = vmul.f32 %v776, %v779
    %v785 = vadd.f32 %v783, %v784
    %v786 = vtanh.pop %v785
    %v787 = vmul.f32 %v778, %v786
    %v789 = vrot.slane %v787, 2
    %791 = vmatprep.subr.mxu0 %v200
    %792 = vmatpush1.msra.mxu0 %v199
    %793 = vmatprep.subr.mxu0 %v204
    %794 = vmatpush1.msra.mxu0 %v203
    %795 = vmatprep.subr.mxu0 %v208
    %796 = vmatpush1.msra.mxu0 %v207
    %797 = vmatprep.subr.mxu0 %v212
    %798 = vmatpush1.msra.mxu0 %v211
    %799 = vmatprep.subr.mxu0 %v216
    %800 = vmatpush1.msra.mxu0 %v215
    %801 = vmatprep.subr.mxu0 %v220
    %802 = vmatpush1.msra.mxu0 %v219
    %803 = vmatprep.subr.mxu0 %v224
    %804 = vmatpush1.msra.mxu0 %v223
    %805 = vmatprep.subr.mxu0 %v228
    %806 = vmatpush1.msra.mxu0 %v227
    %807 = vmatprep.subr.mxu0 %v232
    %808 = vmatpush1.msra.mxu0 %v231
    %809 = vmatprep.subr.mxu0 %v236
    %810 = vmatpush1.msra.mxu0 %v235
    %811 = vmatprep.subr.mxu0 %v240
    %812 = vmatpush1.msra.mxu0 %v239
    %813 = vmatprep.subr.mxu0 %v244
    %814 = vmatpush1.msra.mxu0 %v243
    %815 = vmatprep.subr.mxu0 %v248
    %816 = vmatpush1.msra.mxu0 %v247
    %817 = vmatprep.subr.mxu0 %v252
    %818 = vmatpush1.msra.mxu0 %v251
    %819 = vmatprep.subr.mxu0 %v256
    %820 = vmatpush1.msra.mxu0 %v255
    %821 = vmatprep.subr.mxu0 %v260
    %822 = vmatpush1.msra.mxu0 %v259
    %823 = vmatprep.subr.mxu0 0.0
    %824 = vmatpush1.msra.mxu0 0.0
    %825 = vmatprep.subr.mxu0 0.0
    %826 = vmatpush1.msra.mxu0 0.0
    %827 = vmatprep.subr.mxu0 0.0
    %828 = vmatpush1.msra.mxu0 0.0
    %829 = vmatprep.subr.mxu0 0.0
    %830 = vmatpush1.msra.mxu0 0.0
    %831 = vmatprep.subr.mxu0 0.0
    %832 = vmatpush1.msra.mxu0 0.0
    %833 = vmatprep.subr.mxu0 0.0
    %834 = vmatpush1.msra.mxu0 0.0
    %835 = vmatprep.subr.mxu0 0.0
    %836 = vmatpush1.msra.mxu0 0.0
    %837 = vmatprep.subr.mxu0 0.0
    %838 = vmatpush1.msra.mxu0 0.0
    %839 = vmatprep.subr.mxu0 0.0
    %840 = vmatpush1.msra.mxu0 0.0
    %841 = vmatprep.subr.mxu0 0.0
    %842 = vmatpush1.msra.mxu0 0.0
    %843 = vmatprep.subr.mxu0 0.0
    %844 = vmatpush1.msra.mxu0 0.0
    %845 = vmatprep.subr.mxu0 0.0
    %846 = vmatpush1.msra.mxu0 0.0
    %847 = vmatprep.subr.mxu0 0.0
    %848 = vmatpush1.msra.mxu0 0.0
    %849 = vmatprep.subr.mxu0 0.0
    %850 = vmatpush1.msra.mxu0 0.0
    %851 = vmatprep.subr.mxu0 0.0
    %852 = vmatpush1.msra.mxu0 0.0
    %853 = vmatprep.subr.mxu0 0.0
    %854 = vmatpush1.msra.mxu0 0.0
    %855 = vmatprep.mubr.f32.mxu0 0.0
    %856 = vmatmul.mubr.f32.gmra.mrb[0].mxu0 %v789
    %v857 = vpop.f32.mrb[0].mxu0
    %v858 = vadd.f32 0.0, %v857
    %v859 = vpop.f32.mrb[0].mxu0
    %v860 = vadd.f32 0.0, %v859
    %861 = vdwg.mxu0
    %862 = vmatprep.subr.mxu0 %v202
    %863 = vmatpush1.msra.mxu0 %v201
    %864 = vmatprep.subr.mxu0 %v206
    %865 = vmatpush1.msra.mxu0 %v205
    %866 = vmatprep.subr.mxu0 %v210
    %867 = vmatpush1.msra.mxu0 %v209
    %868 = vmatprep.subr.mxu0 %v214
    %869 = vmatpush1.msra.mxu0 %v213
    %870 = vmatprep.subr.mxu0 %v218
    %871 = vmatpush1.msra.mxu0 %v217
    %872 = vmatprep.subr.mxu0 %v222
    %873 = vmatpush1.msra.mxu0 %v221
    %874 = vmatprep.subr.mxu0 %v226
    %875 = vmatpush1.msra.mxu0 %v225
    %876 = vmatprep.subr.mxu0 %v230
    %877 = vmatpush1.msra.mxu0 %v229
    %878 = vmatprep.subr.mxu0 %v234
    %879 = vmatpush1.msra.mxu0 %v233
    %880 = vmatprep.subr.mxu0 %v238
    %881 = vmatpush1.msra.mxu0 %v237
    %882 = vmatprep.subr.mxu0 %v242
    %883 = vmatpush1.msra.mxu0 %v241
    %884 = vmatprep.subr.mxu0 %v246
    %885 = vmatpush1.msra.mxu0 %v245
    %886 = vmatprep.subr.mxu0 %v250
    %887 = vmatpush1.msra.mxu0 %v249
    %888 = vmatprep.subr.mxu0 %v254
    %889 = vmatpush1.msra.mxu0 %v253
    %890 = vmatprep.subr.mxu0 %v258
    %891 = vmatpush1.msra.mxu0 %v257
    %892 = vmatprep.subr.mxu0 %v262
    %893 = vmatpush1.msra.mxu0 %v261
    %894 = vmatprep.subr.mxu0 0.0
    %895 = vmatpush1.msra.mxu0 0.0
    %896 = vmatprep.subr.mxu0 0.0
    %897 = vmatpush1.msra.mxu0 0.0
    %898 = vmatprep.subr.mxu0 0.0
    %899 = vmatpush1.msra.mxu0 0.0
    %900 = vmatprep.subr.mxu0 0.0
    %901 = vmatpush1.msra.mxu0 0.0
    %902 = vmatprep.subr.mxu0 0.0
    %903 = vmatpush1.msra.mxu0 0.0
    %904 = vmatprep.subr.mxu0 0.0
    %905 = vmatpush1.msra.mxu0 0.0
    %906 = vmatprep.subr.mxu0 0.0
    %907 = vmatpush1.msra.mxu0 0.0
    %908 = vmatprep.subr.mxu0 0.0
    %909 = vmatpush1.msra.mxu0 0.0
    %910 = vmatprep.subr.mxu0 0.0
    %911 = vmatpush1.msra.mxu0 0.0
    %912 = vmatprep.subr.mxu0 0.0
    %913 = vmatpush1.msra.mxu0 0.0
    %914 = vmatprep.subr.mxu0 0.0
    %915 = vmatpush1.msra.mxu0 0.0
    %916 = vmatprep.subr.mxu0 0.0
    %917 = vmatpush1.msra.mxu0 0.0
    %918 = vmatprep.subr.mxu0 0.0
    %919 = vmatpush1.msra.mxu0 0.0
    %920 = vmatprep.subr.mxu0 0.0
    %921 = vmatpush1.msra.mxu0 0.0
    %922 = vmatprep.subr.mxu0 0.0
    %923 = vmatpush1.msra.mxu0 0.0
    %924 = vmatprep.subr.mxu0 0.0
    %925 = vmatpush1.msra.mxu0 0.0
    %926 = vmatprep.mubr.f32.mxu0 0.0
    %927 = vmatmul.mubr.f32.gmra.mrb[0].mxu0 %v789
    %v928 = vpop.f32.mrb[0].mxu0
    %v929 = vadd.f32 0.0, %v928
    %v930 = vpop.f32.mrb[0].mxu0
    %v931 = vadd.f32 0.0, %v930
    %932 = vdwg.mxu0
    %v937 = vrot.slane %v858, 5
    %v938 = vrot.slane %v860, 5
    %v939 = vrot.slane %v929, 5
    %v940 = vrot.slane %v931, 5
    %v945 = vadd.f32 %v124, %v937
    %v946 = vadd.f32 %v126, %v938
    %v947 = vadd.f32 %v195, %v939
    %v948 = vadd.f32 %v197, %v940
    %v949 = vmul.f32 %v945, 0.5
    %v950 = vmul.f32 %v946, 0.5
    %v951 = vmul.f32 %v947, 0.5
    %v952 = vtanh.pop %v949
    %v953 = vtanh.pop %v950
    %v954 = vtanh.pop %v951
    %v955 = vadd.f32 %v952, 1.0
    %v956 = vadd.f32 %v953, 1.0
    %v957 = vadd.f32 %v954, 1.0
    %v958 = vmul.f32 %v955, 0.5
    %v959 = vmul.f32 %v956, 0.5
    %v960 = vmul.f32 %v957, 0.5
    %v961 = vtanh.pop %v948
    %v963 = vrot.slane %v785, 7
    %v965 = vmul.f32 %v959, %v963
    %v966 = vmul.f32 %v958, %v961
    %v967 = vadd.f32 %v965, %v966
    %v968 = vtanh.pop %v967
    %v969 = vmul.f32 %v960, %v968
    %v971 = vrot.slane %v969, 3
    %973 = vmatprep.subr.mxu0 %v200
    %974 = vmatpush1.msra.mxu0 %v199
    %975 = vmatprep.subr.mxu0 %v204
    %976 = vmatpush1.msra.mxu0 %v203
    %977 = vmatprep.subr.mxu0 %v208
    %978 = vmatpush1.msra.mxu0 %v207
    %979 = vmatprep.subr.mxu0 %v212
    %980 = vmatpush1.msra.mxu0 %v211
    %981 = vmatprep.subr.mxu0 %v216
    %982 = vmatpush1.msra.mxu0 %v215
    %983 = vmatprep.subr.mxu0 %v220
    %984 = vmatpush1.msra.mxu0 %v219
    %985 = vmatprep.subr.mxu0 %v224
    %986 = vmatpush1.msra.mxu0 %v223
    %987 = vmatprep.subr.mxu0 %v228
    %988 = vmatpush1.msra.mxu0 %v227
    %989 = vmatprep.subr.mxu0 %v232
    %990 = vmatpush1.msra.mxu0 %v231
    %991 = vmatprep.subr.mxu0 %v236
    %992 = vmatpush1.msra.mxu0 %v235
    %993 = vmatprep.subr.mxu0 %v240
    %994 = vmatpush1.msra.mxu0 %v239
    %995 = vmatprep.subr.mxu0 %v244
    %996 = vmatpush1.msra.mxu0 %v243
    %997 = vmatprep.subr.mxu0 %v248
    %998 = vmatpush1.msra.mxu0 %v247
    %999 = vmatprep.subr.mxu0 %v252
    %1000 = vmatpush1.msra.mxu0 %v251
    %1001 = vmatprep.subr.mxu0 %v256
    %1002 = vmatpush1.msra.mxu0 %v255
    %1003 = vmatprep.subr.mxu0 %v260
    %1004 = vmatpush1.msra.mxu0 %v259
    %1005 = vmatprep.subr.mxu0 0.0
    %1006 = vmatpush1.msra.mxu0 0.0
    %1007 = vmatprep.subr.mxu0 0.0
    %1008 = vmatpush1.msra.mxu0 0.0
    %1009 = vmatprep.subr.mxu0 0.0
    %1010 = vmatpush1.msra.mxu0 0.0
    %1011 = vmatprep.subr.mxu0 0.0
    %1012 = vmatpush1.msra.mxu0 0.0
    %1013 = vmatprep.subr.mxu0 0.0
    %1014 = vmatpush1.msra.mxu0 0.0
    %1015 = vmatprep.subr.mxu0 0.0
    %1016 = vmatpush1.msra.mxu0 0.0
    %1017 = vmatprep.subr.mxu0 0.0
    %1018 = vmatpush1.msra.mxu0 0.0
    %1019 = vmatprep.subr.mxu0 0.0
    %1020 = vmatpush1.msra.mxu0 0.0
    %1021 = vmatprep.subr.mxu0 0.0
    %1022 = vmatpush1.msra.mxu0 0.0
    %1023 = vmatprep.subr.mxu0 0.0
    %1024 = vmatpush1.msra.mxu0 0.0
    %1025 = vmatprep.subr.mxu0 0.0
    %1026 = vmatpush1.msra.mxu0 0.0
    %1027 = vmatprep.subr.mxu0 0.0
    %1028 = vmatpush1.msra.mxu0 0.0
    %1029 = vmatprep.subr.mxu0 0.0
    %1030 = vmatpush1.msra.mxu0 0.0
    %1031 = vmatprep.subr.mxu0 0.0
    %1032 = vmatpush1.msra.mxu0 0.0
    %1033 = vmatprep.subr.mxu0 0.0
    %1034 = vmatpush1.msra.mxu0 0.0
    %1035 = vmatprep.subr.mxu0 0.0
    %1036 = vmatpush1.msra.mxu0 0.0
    %1037 = vmatprep.mubr.f32.mxu0 0.0
    %1038 = vmatmul.mubr.f32.gmra.mrb[0].mxu0 %v971
    %v1039 = vpop.f32.mrb[0].mxu0
    %v1040 = vadd.f32 0.0, %v1039
    %v1041 = vpop.f32.mrb[0].mxu0
    %v1042 = vadd.f32 0.0, %v1041
    %1043 = vdwg.mxu0
    %1044 = vmatprep.subr.mxu0 %v202
    %1045 = vmatpush1.msra.mxu0 %v201
    %1046 = vmatprep.subr.mxu0 %v206
    %1047 = vmatpush1.msra.mxu0 %v205
    %1048 = vmatprep.subr.mxu0 %v210
    %1049 = vmatpush1.msra.mxu0 %v209
    %1050 = vmatprep.subr.mxu0 %v214
    %1051 = vmatpush1.msra.mxu0 %v213
    %1052 = vmatprep.subr.mxu0 %v218
    %1053 = vmatpush1.msra.mxu0 %v217
    %1054 = vmatprep.subr.mxu0 %v222
    %1055 = vmatpush1.msra.mxu0 %v221
    %1056 = vmatprep.subr.mxu0 %v226
    %1057 = vmatpush1.msra.mxu0 %v225
    %1058 = vmatprep.subr.mxu0 %v230
    %1059 = vmatpush1.msra.mxu0 %v229
    %1060 = vmatprep.subr.mxu0 %v234
    %1061 = vmatpush1.msra.mxu0 %v233
    %1062 = vmatprep.subr.mxu0 %v238
    %1063 = vmatpush1.msra.mxu0 %v237
    %1064 = vmatprep.subr.mxu0 %v242
    %1065 = vmatpush1.msra.mxu0 %v241
    %1066 = vmatprep.subr.mxu0 %v246
    %1067 = vmatpush1.msra.mxu0 %v245
    %1068 = vmatprep.subr.mxu0 %v250
    %1069 = vmatpush1.msra.mxu0 %v249
    %1070 = vmatprep.subr.mxu0 %v254
    %1071 = vmatpush1.msra.mxu0 %v253
    %1072 = vmatprep.subr.mxu0 %v258
    %1073 = vmatpush1.msra.mxu0 %v257
    %1074 = vmatprep.subr.mxu0 %v262
    %1075 = vmatpush1.msra.mxu0 %v261
    %1076 = vmatprep.subr.mxu0 0.0
    %1077 = vmatpush1.msra.mxu0 0.0
    %1078 = vmatprep.subr.mxu0 0.0
    %1079 = vmatpush1.msra.mxu0 0.0
    %1080 = vmatprep.subr.mxu0 0.0
    %1081 = vmatpush1.msra.mxu0 0.0
    %1082 = vmatprep.subr.mxu0 0.0
    %1083 = vmatpush1.msra.mxu0 0.0
    %1084 = vmatprep.subr.mxu0 0.0
    %1085 = vmatpush1.msra.mxu0 0.0
    %1086 = vmatprep.subr.mxu0 0.0
    %1087 = vmatpush1.msra.mxu0 0.0
    %1088 = vmatprep.subr.mxu0 0.0
    %1089 = vmatpush1.msra.mxu0 0.0
    %1090 = vmatprep.subr.mxu0 0.0
    %1091 = vmatpush1.msra.mxu0 0.0
    %1092 = vmatprep.subr.mxu0 0.0
    %1093 = vmatpush1.msra.mxu0 0.0
    %1094 = vmatprep.subr.mxu0 0.0
    %1095 = vmatpush1.msra.mxu0 0.0
    %1096 = vmatprep.subr.mxu0 0.0
    %1097 = vmatpush1.msra.mxu0 0.0
    %1098 = vmatprep.subr.mxu0 0.0
    %1099 = vmatpush1.msra.mxu0 0.0
    %1100 = vmatprep.subr.mxu0 0.0
    %1101 = vmatpush1.msra.mxu0 0.0
    %1102 = vmatprep.subr.mxu0 0.0
    %1103 = vmatpush1.msra.mxu0 0.0
    %1104 = vmatprep.subr.mxu0 0.0
    %1105 = vmatpush1.msra.mxu0 0.0
    %1106 = vmatprep.subr.mxu0 0.0
    %1107 = vmatpush1.msra.mxu0 0.0
    %1108 = vmatprep.mubr.f32.mxu0 0.0
    %1109 = vmatmul.mubr.f32.gmra.mrb[0].mxu0 %v971
    %v1110 = vpop.f32.mrb[0].mxu0
    %v1111 = vadd.f32 0.0, %v1110
    %v1112 = vpop.f32.mrb[0].mxu0
    %v1113 = vadd.f32 0.0, %v1112
    %1114 = vdwg.mxu0
    %v1119 = vrot.slane %v1040, 4
    %v1120 = vrot.slane %v1042, 4
    %v1121 = vrot.slane %v1111, 4
    %v1122 = vrot.slane %v1113, 4
    %v1127 = vadd.f32 %v124, %v1119
    %v1128 = vadd.f32 %v126, %v1120
    %v1129 = vadd.f32 %v195, %v1121
    %v1130 = vadd.f32 %v197, %v1122
    %v1131 = vmul.f32 %v1127, 0.5
    %v1132 = vmul.f32 %v1128, 0.5
    %v1133 = vmul.f32 %v1129, 0.5
    %v1134 = vtanh.pop %v1131
    %v1135 = vtanh.pop %v1132
    %v1136 = vtanh.pop %v1133
    %v1137 = vadd.f32 %v1134, 1.0
    %v1138 = vadd.f32 %v1135, 1.0
    %v1139 = vadd.f32 %v1136, 1.0
    %v1140 = vmul.f32 %v1137, 0.5
    %v1141 = vmul.f32 %v1138, 0.5
    %v1142 = vmul.f32 %v1139, 0.5
    %v1143 = vtanh.pop %v1130
    %v1145 = vrot.slane %v967, 7
    %v1147 = vmul.f32 %v1141, %v1145
    %v1148 = vmul.f32 %v1140, %v1143
    %v1149 = vadd.f32 %v1147, %v1148
    %v1150 = vtanh.pop %v1149
    %v1151 = vmul.f32 %v1142, %v1150
    %v1153 = vrot.slane %v1151, 4
    %1155 = vmatprep.subr.mxu0 %v200
    %1156 = vmatpush1.msra.mxu0 %v199
    %1157 = vmatprep.subr.mxu0 %v204
    %1158 = vmatpush1.msra.mxu0 %v203
    %1159 = vmatprep.subr.mxu0 %v208
    %1160 = vmatpush1.msra.mxu0 %v207
    %1161 = vmatprep.subr.mxu0 %v212
    %1162 = vmatpush1.msra.mxu0 %v211
    %1163 = vmatprep.subr.mxu0 %v216
    %1164 = vmatpush1.msra.mxu0 %v215
    %1165 = vmatprep.subr.mxu0 %v220
    %1166 = vmatpush1.msra.mxu0 %v219
    %1167 = vmatprep.subr.mxu0 %v224
    %1168 = vmatpush1.msra.mxu0 %v223
    %1169 = vmatprep.subr.mxu0 %v228
    %1170 = vmatpush1.msra.mxu0 %v227
    %1171 = vmatprep.subr.mxu0 %v232
    %1172 = vmatpush1.msra.mxu0 %v231
    %1173 = vmatprep.subr.mxu0 %v236
    %1174 = vmatpush1.msra.mxu0 %v235
    %1175 = vmatprep.subr.mxu0 %v240
    %1176 = vmatpush1.msra.mxu0 %v239
    %1177 = vmatprep.subr.mxu0 %v244
    %1178 = vmatpush1.msra.mxu0 %v243
    %1179 = vmatprep.subr.mxu0 %v248
    %1180 = vmatpush1.msra.mxu0 %v247
    %1181 = vmatprep.subr.mxu0 %v252
    %1182 = vmatpush1.msra.mxu0 %v251
    %1183 = vmatprep.subr.mxu0 %v256
    %1184 = vmatpush1.msra.mxu0 %v255
    %1185 = vmatprep.subr.mxu0 %v260
    %1186 = vmatpush1.msra.mxu0 %v259
    %1187 = vmatprep.subr.mxu0 0.0
    %1188 = vmatpush1.msra.mxu0 0.0
    %1189 = vmatprep.subr.mxu0 0.0
    %1190 = vmatpush1.msra.mxu0 0.0
    %1191 = vmatprep.subr.mxu0 0.0
    %1192 = vmatpush1.msra.mxu0 0.0
    %1193 = vmatprep.subr.mxu0 0.0
    %1194 = vmatpush1.msra.mxu0 0.0
    %1195 = vmatprep.subr.mxu0 0.0
    %1196 = vmatpush1.msra.mxu0 0.0
    %1197 = vmatprep.subr.mxu0 0.0
    %1198 = vmatpush1.msra.mxu0 0.0
    %1199 = vmatprep.subr.mxu0 0.0
    %1200 = vmatpush1.msra.mxu0 0.0
    %1201 = vmatprep.subr.mxu0 0.0
    %1202 = vmatpush1.msra.mxu0 0.0
    %1203 = vmatprep.subr.mxu0 0.0
    %1204 = vmatpush1.msra.mxu0 0.0
    %1205 = vmatprep.subr.mxu0 0.0
    %1206 = vmatpush1.msra.mxu0 0.0
    %1207 = vmatprep.subr.mxu0 0.0
    %1208 = vmatpush1.msra.mxu0 0.0
    %1209 = vmatprep.subr.mxu0 0.0
    %1210 = vmatpush1.msra.mxu0 0.0
    %1211 = vmatprep.subr.mxu0 0.0
    %1212 = vmatpush1.msra.mxu0 0.0
    %1213 = vmatprep.subr.mxu0 0.0
    %1214 = vmatpush1.msra.mxu0 0.0
    %1215 = vmatprep.subr.mxu0 0.0
    %1216 = vmatpush1.msra.mxu0 0.0
    %1217 = vmatprep.subr.mxu0 0.0
    %1218 = vmatpush1.msra.mxu0 0.0
    %1219 = vmatprep.mubr.f32.mxu0 0.0
    %1220 = vmatmul.mubr.f32.gmra.mrb[0].mxu0 %v1153
    %v1221 = vpop.f32.mrb[0].mxu0
    %v1222 = vadd.f32 0.0, %v1221
    %v1223 = vpop.f32.mrb[0].mxu0
    %v1224 = vadd.f32 0.0, %v1223
    %1225 = vdwg.mxu0
    %1226 = vmatprep.subr.mxu0 %v202
    %1227 = vmatpush1.msra.mxu0 %v201
    %1228 = vmatprep.subr.mxu0 %v206
    %1229 = vmatpush1.msra.mxu0 %v205
    %1230 = vmatprep.subr.mxu0 %v210
    %1231 = vmatpush1.msra.mxu0 %v209
    %1232 = vmatprep.subr.mxu0 %v214
    %1233 = vmatpush1.msra.mxu0 %v213
    %1234 = vmatprep.subr.mxu0 %v218
    %1235 = vmatpush1.msra.mxu0 %v217
    %1236 = vmatprep.subr.mxu0 %v222
    %1237 = vmatpush1.msra.mxu0 %v221
    %1238 = vmatprep.subr.mxu0 %v226
    %1239 = vmatpush1.msra.mxu0 %v225
    %1240 = vmatprep.subr.mxu0 %v230
    %1241 = vmatpush1.msra.mxu0 %v229
    %1242 = vmatprep.subr.mxu0 %v234
    %1243 = vmatpush1.msra.mxu0 %v233
    %1244 = vmatprep.subr.mxu0 %v238
    %1245 = vmatpush1.msra.mxu0 %v237
    %1246 = vmatprep.subr.mxu0 %v242
    %1247 = vmatpush1.msra.mxu0 %v241
    %1248 = vmatprep.subr.mxu0 %v246
    %1249 = vmatpush1.msra.mxu0 %v245
    %1250 = vmatprep.subr.mxu0 %v250
    %1251 = vmatpush1.msra.mxu0 %v249
    %1252 = vmatprep.subr.mxu0 %v254
    %1253 = vmatpush1.msra.mxu0 %v253
    %1254 = vmatprep.subr.mxu0 %v258
    %1255 = vmatpush1.msra.mxu0 %v257
    %1256 = vmatprep.subr.mxu0 %v262
    %1257 = vmatpush1.msra.mxu0 %v261
    %1258 = vmatprep.subr.mxu0 0.0
    %1259 = vmatpush1.msra.mxu0 0.0
    %1260 = vmatprep.subr.mxu0 0.0
    %1261 = vmatpush1.msra.mxu0 0.0
    %1262 = vmatprep.subr.mxu0 0.0
    %1263 = vmatpush1.msra.mxu0 0.0
    %1264 = vmatprep.subr.mxu0 0.0
    %1265 = vmatpush1.msra.mxu0 0.0
    %1266 = vmatprep.subr.mxu0 0.0
    %1267 = vmatpush1.msra.mxu0 0.0
    %1268 = vmatprep.subr.mxu0 0.0
    %1269 = vmatpush1.msra.mxu0 0.0
    %1270 = vmatprep.subr.mxu0 0.0
    %1271 = vmatpush1.msra.mxu0 0.0
    %1272 = vmatprep.subr.mxu0 0.0
    %1273 = vmatpush1.msra.mxu0 0.0
    %1274 = vmatprep.subr.mxu0 0.0
    %1275 = vmatpush1.msra.mxu0 0.0
    %1276 = vmatprep.subr.mxu0 0.0
    %1277 = vmatpush1.msra.mxu0 0.0
    %1278 = vmatprep.subr.mxu0 0.0
    %1279 = vmatpush1.msra.mxu0 0.0
    %1280 = vmatprep.subr.mxu0 0.0
    %1281 = vmatpush1.msra.mxu0 0.0
    %1282 = vmatprep.subr.mxu0 0.0
    %1283 = vmatpush1.msra.mxu0 0.0
    %1284 = vmatprep.subr.mxu0 0.0
    %1285 = vmatpush1.msra.mxu0 0.0
    %1286 = vmatprep.subr.mxu0 0.0
    %1287 = vmatpush1.msra.mxu0 0.0
    %1288 = vmatprep.subr.mxu0 0.0
    %1289 = vmatpush1.msra.mxu0 0.0
    %1290 = vmatprep.mubr.f32.mxu0 0.0
    %1291 = vmatmul.mubr.f32.gmra.mrb[0].mxu0 %v1153
    %v1292 = vpop.f32.mrb[0].mxu0
    %v1293 = vadd.f32 0.0, %v1292
    %v1294 = vpop.f32.mrb[0].mxu0
    %v1295 = vadd.f32 0.0, %v1294
    %1296 = vdwg.mxu0
    %v1301 = vrot.slane %v1222, 3
    %v1302 = vrot.slane %v1224, 3
    %v1303 = vrot.slane %v1293, 3
    %v1304 = vrot.slane %v1295, 3
    %v1309 = vadd.f32 %v124, %v1301
    %v1310 = vadd.f32 %v126, %v1302
    %v1311 = vadd.f32 %v195, %v1303
    %v1312 = vadd.f32 %v197, %v1304
    %v1313 = vmul.f32 %v1309, 0.5
    %v1314 = vmul.f32 %v1310, 0.5
    %v1315 = vmul.f32 %v1311, 0.5
    %v1316 = vtanh.pop %v1313
    %v1317 = vtanh.pop %v1314
    %v1318 = vtanh.pop %v1315
    %v1319 = vadd.f32 %v1316, 1.0
    %v1320 = vadd.f32 %v1317, 1.0
    %v1321 = vadd.f32 %v1318, 1.0
    %v1322 = vmul.f32 %v1319, 0.5
    %v1323 = vmul.f32 %v1320, 0.5
    %v1324 = vmul.f32 %v1321, 0.5
    %v1325 = vtanh.pop %v1312
    %v1327 = vrot.slane %v1149, 7
    %v1329 = vmul.f32 %v1323, %v1327
    %v1330 = vmul.f32 %v1322, %v1325
    %v1331 = vadd.f32 %v1329, %v1330
    %v1332 = vtanh.pop %v1331
    %v1333 = vmul.f32 %v1324, %v1332
    %v1335 = vrot.slane %v1333, 5
    %1337 = vmatprep.subr.mxu0 %v200
    %1338 = vmatpush1.msra.mxu0 %v199
    %1339 = vmatprep.subr.mxu0 %v204
    %1340 = vmatpush1.msra.mxu0 %v203
    %1341 = vmatprep.subr.mxu0 %v208
    %1342 = vmatpush1.msra.mxu0 %v207
    %1343 = vmatprep.subr.mxu0 %v212
    %1344 = vmatpush1.msra.mxu0 %v211
    %1345 = vmatprep.subr.mxu0 %v216
    %1346 = vmatpush1.msra.mxu0 %v215
    %1347 = vmatprep.subr.mxu0 %v220
    %1348 = vmatpush1.msra.mxu0 %v219
    %1349 = vmatprep.subr.mxu0 %v224
    %1350 = vmatpush1.msra.mxu0 %v223
    %1351 = vmatprep.subr.mxu0 %v228
    %1352 = vmatpush1.msra.mxu0 %v227
    %1353 = vmatprep.subr.mxu0 %v232
    %1354 = vmatpush1.msra.mxu0 %v231
    %1355 = vmatprep.subr.mxu0 %v236
    %1356 = vmatpush1.msra.mxu0 %v235
    %1357 = vmatprep.subr.mxu0 %v240
    %1358 = vmatpush1.msra.mxu0 %v239
    %1359 = vmatprep.subr.mxu0 %v244
    %1360 = vmatpush1.msra.mxu0 %v243
    %1361 = vmatprep.subr.mxu0 %v248
    %1362 = vmatpush1.msra.mxu0 %v247
    %1363 = vmatprep.subr.mxu0 %v252
    %1364 = vmatpush1.msra.mxu0 %v251
    %1365 = vmatprep.subr.mxu0 %v256
    %1366 = vmatpush1.msra.mxu0 %v255
    %1367 = vmatprep.subr.mxu0 %v260
    %1368 = vmatpush1.msra.mxu0 %v259
    %1369 = vmatprep.subr.mxu0 0.0
    %1370 = vmatpush1.msra.mxu0 0.0
    %1371 = vmatprep.subr.mxu0 0.0
    %1372 = vmatpush1.msra.mxu0 0.0
    %1373 = vmatprep.subr.mxu0 0.0
    %1374 = vmatpush1.msra.mxu0 0.0
    %1375 = vmatprep.subr.mxu0 0.0
    %1376 = vmatpush1.msra.mxu0 0.0
    %1377 = vmatprep.subr.mxu0 0.0
    %1378 = vmatpush1.msra.mxu0 0.0
    %1379 = vmatprep.subr.mxu0 0.0
    %1380 = vmatpush1.msra.mxu0 0.0
    %1381 = vmatprep.subr.mxu0 0.0
    %1382 = vmatpush1.msra.mxu0 0.0
    %1383 = vmatprep.subr.mxu0 0.0
    %1384 = vmatpush1.msra.mxu0 0.0
    %1385 = vmatprep.subr.mxu0 0.0
    %1386 = vmatpush1.msra.mxu0 0.0
    %1387 = vmatprep.subr.mxu0 0.0
    %1388 = vmatpush1.msra.mxu0 0.0
    %1389 = vmatprep.subr.mxu0 0.0
    %1390 = vmatpush1.msra.mxu0 0.0
    %1391 = vmatprep.subr.mxu0 0.0
    %1392 = vmatpush1.msra.mxu0 0.0
    %1393 = vmatprep.subr.mxu0 0.0
    %1394 = vmatpush1.msra.mxu0 0.0
    %1395 = vmatprep.subr.mxu0 0.0
    %1396 = vmatpush1.msra.mxu0 0.0
    %1397 = vmatprep.subr.mxu0 0.0
    %1398 = vmatpush1.msra.mxu0 0.0
    %1399 = vmatprep.subr.mxu0 0.0
    %1400 = vmatpush1.msra.mxu0 0.0
    %1401 = vmatprep.mubr.f32.mxu0 0.0
    %1402 = vmatmul.mubr.f32.gmra.mrb[0].mxu0 %v1335
    %v1403 = vpop.f32.mrb[0].mxu0
    %v1404 = vadd.f32 0.0, %v1403
    %v1405 = vpop.f32.mrb[0].mxu0
    %v1406 = vadd.f32 0.0, %v1405
    %1407 = vdwg.mxu0
    %1408 = vmatprep.subr.mxu0 %v202
    %1409 = vmatpush1.msra.mxu0 %v201
    %1410 = vmatprep.subr.mxu0 %v206
    %1411 = vmatpush1.msra.mxu0 %v205
    %1412 = vmatprep.subr.mxu0 %v210
    %1413 = vmatpush1.msra.mxu0 %v209
    %1414 = vmatprep.subr.mxu0 %v214
    %1415 = vmatpush1.msra.mxu0 %v213
    %1416 = vmatprep.subr.mxu0 %v218
    %1417 = vmatpush1.msra.mxu0 %v217
    %1418 = vmatprep.subr.mxu0 %v222
    %1419 = vmatpush1.msra.mxu0 %v221
    %1420 = vmatprep.subr.mxu0 %v226
    %1421 = vmatpush1.msra.mxu0 %v225
    %1422 = vmatprep.subr.mxu0 %v230
    %1423 = vmatpush1.msra.mxu0 %v229
    %1424 = vmatprep.subr.mxu0 %v234
    %1425 = vmatpush1.msra.mxu0 %v233
    %1426 = vmatprep.subr.mxu0 %v238
    %1427 = vmatpush1.msra.mxu0 %v237
    %1428 = vmatprep.subr.mxu0 %v242
    %1429 = vmatpush1.msra.mxu0 %v241
    %1430 = vmatprep.subr.mxu0 %v246
    %1431 = vmatpush1.msra.mxu0 %v245
    %1432 = vmatprep.subr.mxu0 %v250
    %1433 = vmatpush1.msra.mxu0 %v249
    %1434 = vmatprep.subr.mxu0 %v254
    %1435 = vmatpush1.msra.mxu0 %v253
    %1436 = vmatprep.subr.mxu0 %v258
    %1437 = vmatpush1.msra.mxu0 %v257
    %1438 = vmatprep.subr.mxu0 %v262
    %1439 = vmatpush1.msra.mxu0 %v261
    %1440 = vmatprep.subr.mxu0 0.0
    %1441 = vmatpush1.msra.mxu0 0.0
    %1442 = vmatprep.subr.mxu0 0.0
    %1443 = vmatpush1.msra.mxu0 0.0
    %1444 = vmatprep.subr.mxu0 0.0
    %1445 = vmatpush1.msra.mxu0 0.0
    %1446 = vmatprep.subr.mxu0 0.0
    %1447 = vmatpush1.msra.mxu0 0.0
    %1448 = vmatprep.subr.mxu0 0.0
    %1449 = vmatpush1.msra.mxu0 0.0
    %1450 = vmatprep.subr.mxu0 0.0
    %1451 = vmatpush1.msra.mxu0 0.0
    %1452 = vmatprep.subr.mxu0 0.0
    %1453 = vmatpush1.msra.mxu0 0.0
    %1454 = vmatprep.subr.mxu0 0.0
    %1455 = vmatpush1.msra.mxu0 0.0
    %1456 = vmatprep.subr.mxu0 0.0
    %1457 = vmatpush1.msra.mxu0 0.0
    %1458 = vmatprep.subr.mxu0 0.0
    %1459 = vmatpush1.msra.mxu0 0.0
    %1460 = vmatprep.subr.mxu0 0.0
    %1461 = vmatpush1.msra.mxu0 0.0
    %1462 = vmatprep.subr.mxu0 0.0
    %1463 = vmatpush1.msra.mxu0 0.0
    %1464 = vmatprep.subr.mxu0 0.0
    %1465 = vmatpush1.msra.mxu0 0.0
    %1466 = vmatprep.subr.mxu0 0.0
    %1467 = vmatpush1.msra.mxu0 0.0
    %1468 = vmatprep.subr.mxu0 0.0
    %1469 = vmatpush1.msra.mxu0 0.0
    %1470 = vmatprep.subr.mxu0 0.0
    %1471 = vmatpush1.msra.mxu0 0.0
    %1472 = vmatprep.mubr.f32.mxu0 0.0
    %1473 = vmatmul.mubr.f32.gmra.mrb[0].mxu0 %v1335
    %v1474 = vpop.f32.mrb[0].mxu0
    %v1475 = vadd.f32 0.0, %v1474
    %v1476 = vpop.f32.mrb[0].mxu0
    %v1477 = vadd.f32 0.0, %v1476
    %1478 = vdwg.mxu0
    %v1483 = vrot.slane %v1404, 2
    %v1484 = vrot.slane %v1406, 2
    %v1485 = vrot.slane %v1475, 2
    %v1486 = vrot.slane %v1477, 2
    %v1491 = vadd.f32 %v124, %v1483
    %v1492 = vadd.f32 %v126, %v1484
    %v1493 = vadd.f32 %v195, %v1485
    %v1494 = vadd.f32 %v197, %v1486
    %v1495 = vmul.f32 %v1491, 0.5
    %v1496 = vmul.f32 %v1492, 0.5
    %v1497 = vmul.f32 %v1493, 0.5
    %v1498 = vtanh.pop %v1495
    %v1499 = vtanh.pop %v1496
    %v1500 = vtanh.pop %v1497
    %v1501 = vadd.f32 %v1498, 1.0
    %v1502 = vadd.f32 %v1499, 1.0
    %v1503 = vadd.f32 %v1500, 1.0
    %v1504 = vmul.f32 %v1501, 0.5
    %v1505 = vmul.f32 %v1502, 0.5
    %v1506 = vmul.f32 %v1503, 0.5
    %v1507 = vtanh.pop %v1494
    %v1509 = vrot.slane %v1331, 7
    %v1511 = vmul.f32 %v1505, %v1509
    %v1512 = vmul.f32 %v1504, %v1507
    %v1513 = vadd.f32 %v1511, %v1512
    %v1514 = vtanh.pop %v1513
    %v1515 = vmul.f32 %v1506, %v1514
    %v1517 = vrot.slane %v1515, 6
    %1519 = vmatprep.subr.mxu0 %v200
    %1520 = vmatpush1.msra.mxu0 %v199
    %1521 = vmatprep.subr.mxu0 %v204
    %1522 = vmatpush1.msra.mxu0 %v203
    %1523 = vmatprep.subr.mxu0 %v208
    %1524 = vmatpush1.msra.mxu0 %v207
    %1525 = vmatprep.subr.mxu0 %v212
    %1526 = vmatpush1.msra.mxu0 %v211
    %1527 = vmatprep.subr.mxu0 %v216
    %1528 = vmatpush1.msra.mxu0 %v215
    %1529 = vmatprep.subr.mxu0 %v220
    %1530 = vmatpush1.msra.mxu0 %v219
    %1531 = vmatprep.subr.mxu0 %v224
    %1532 = vmatpush1.msra.mxu0 %v223
    %1533 = vmatprep.subr.mxu0 %v228
    %1534 = vmatpush1.msra.mxu0 %v227
    %1535 = vmatprep.subr.mxu0 %v232
    %1536 = vmatpush1.msra.mxu0 %v231
    %1537 = vmatprep.subr.mxu0 %v236
    %1538 = vmatpush1.msra.mxu0 %v235
    %1539 = vmatprep.subr.mxu0 %v240
    %1540 = vmatpush1.msra.mxu0 %v239
    %1541 = vmatprep.subr.mxu0 %v244
    %1542 = vmatpush1.msra.mxu0 %v243
    %1543 = vmatprep.subr.mxu0 %v248
    %1544 = vmatpush1.msra.mxu0 %v247
    %1545 = vmatprep.subr.mxu0 %v252
    %1546 = vmatpush1.msra.mxu0 %v251
    %1547 = vmatprep.subr.mxu0 %v256
    %1548 = vmatpush1.msra.mxu0 %v255
    %1549 = vmatprep.subr.mxu0 %v260
    %1550 = vmatpush1.msra.mxu0 %v259
    %1551 = vmatprep.subr.mxu0 0.0
    %1552 = vmatpush1.msra.mxu0 0.0
    %1553 = vmatprep.subr.mxu0 0.0
    %1554 = vmatpush1.msra.mxu0 0.0
    %1555 = vmatprep.subr.mxu0 0.0
    %1556 = vmatpush1.msra.mxu0 0.0
    %1557 = vmatprep.subr.mxu0 0.0
    %1558 = vmatpush1.msra.mxu0 0.0
    %1559 = vmatprep.subr.mxu0 0.0
    %1560 = vmatpush1.msra.mxu0 0.0
    %1561 = vmatprep.subr.mxu0 0.0
    %1562 = vmatpush1.msra.mxu0 0.0
    %1563 = vmatprep.subr.mxu0 0.0
    %1564 = vmatpush1.msra.mxu0 0.0
    %1565 = vmatprep.subr.mxu0 0.0
    %1566 = vmatpush1.msra.mxu0 0.0
    %1567 = vmatprep.subr.mxu0 0.0
    %1568 = vmatpush1.msra.mxu0 0.0
    %1569 = vmatprep.subr.mxu0 0.0
    %1570 = vmatpush1.msra.mxu0 0.0
    %1571 = vmatprep.subr.mxu0 0.0
    %1572 = vmatpush1.msra.mxu0 0.0
    %1573 = vmatprep.subr.mxu0 0.0
    %1574 = vmatpush1.msra.mxu0 0.0
    %1575 = vmatprep.subr.mxu0 0.0
    %1576 = vmatpush1.msra.mxu0 0.0
    %1577 = vmatprep.subr.mxu0 0.0
    %1578 = vmatpush1.msra.mxu0 0.0
    %1579 = vmatprep.subr.mxu0 0.0
    %1580 = vmatpush1.msra.mxu0 0.0
    %1581 = vmatprep.subr.mxu0 0.0
    %1582 = vmatpush1.msra.mxu0 0.0
    %1583 = vmatprep.mubr.f32.mxu0 0.0
    %1584 = vmatmul.mubr.f32.gmra.mrb[0].mxu0 %v1517
    %v1585 = vpop.f32.mrb[0].mxu0
    %v1586 = vadd.f32 0.0, %v1585
    %v1587 = vpop.f32.mrb[0].mxu0
    %v1588 = vadd.f32 0.0, %v1587
    %1589 = vdwg.mxu0
    %1590 = vmatprep.subr.mxu0 %v202
    %1591 = vmatpush1.msra.mxu0 %v201
    %1592 = vmatprep.subr.mxu0 %v206
    %1593 = vmatpush1.msra.mxu0 %v205
    %1594 = vmatprep.subr.mxu0 %v210
    %1595 = vmatpush1.msra.mxu0 %v209
    %1596 = vmatprep.subr.mxu0 %v214
    %1597 = vmatpush1.msra.mxu0 %v213
    %1598 = vmatprep.subr.mxu0 %v218
    %1599 = vmatpush1.msra.mxu0 %v217
    %1600 = vmatprep.subr.mxu0 %v222
    %1601 = vmatpush1.msra.mxu0 %v221
    %1602 = vmatprep.subr.mxu0 %v226
    %1603 = vmatpush1.msra.mxu0 %v225
    %1604 = vmatprep.subr.mxu0 %v230
    %1605 = vmatpush1.msra.mxu0 %v229
    %1606 = vmatprep.subr.mxu0 %v234
    %1607 = vmatpush1.msra.mxu0 %v233
    %1608 = vmatprep.subr.mxu0 %v238
    %1609 = vmatpush1.msra.mxu0 %v237
    %1610 = vmatprep.subr.mxu0 %v242
    %1611 = vmatpush1.msra.mxu0 %v241
    %1612 = vmatprep.subr.mxu0 %v246
    %1613 = vmatpush1.msra.mxu0 %v245
    %1614 = vmatprep.subr.mxu0 %v250
    %1615 = vmatpush1.msra.mxu0 %v249
    %1616 = vmatprep.subr.mxu0 %v254
    %1617 = vmatpush1.msra.mxu0 %v253
    %1618 = vmatprep.subr.mxu0 %v258
    %1619 = vmatpush1.msra.mxu0 %v257
    %1620 = vmatprep.subr.mxu0 %v262
    %1621 = vmatpush1.msra.mxu0 %v261
    %1622 = vmatprep.subr.mxu0 0.0
    %1623 = vmatpush1.msra.mxu0 0.0
    %1624 = vmatprep.subr.mxu0 0.0
    %1625 = vmatpush1.msra.mxu0 0.0
    %1626 = vmatprep.subr.mxu0 0.0
    %1627 = vmatpush1.msra.mxu0 0.0
    %1628 = vmatprep.subr.mxu0 0.0
    %1629 = vmatpush1.msra.mxu0 0.0
    %1630 = vmatprep.subr.mxu0 0.0
    %1631 = vmatpush1.msra.mxu0 0.0
    %1632 = vmatprep.subr.mxu0 0.0
    %1633 = vmatpush1.msra.mxu0 0.0
    %1634 = vmatprep.subr.mxu0 0.0
    %1635 = vmatpush1.msra.mxu0 0.0
    %1636 = vmatprep.subr.mxu0 0.0
    %1637 = vmatpush1.msra.mxu0 0.0
    %1638 = vmatprep.subr.mxu0 0.0
    %1639 = vmatpush1.msra.mxu0 0.0
    %1640 = vmatprep.subr.mxu0 0.0
    %1641 = vmatpush1.msra.mxu0 0.0
    %1642 = vmatprep.subr.mxu0 0.0
    %1643 = vmatpush1.msra.mxu0 0.0
    %1644 = vmatprep.subr.mxu0 0.0
    %1645 = vmatpush1.msra.mxu0 0.0
    %1646 = vmatprep.subr.mxu0 0.0
    %1647 = vmatpush1.msra.mxu0 0.0
    %1648 = vmatprep.subr.mxu0 0.0
    %1649 = vmatpush1.msra.mxu0 0.0
    %1650 = vmatprep.subr.mxu0 0.0
    %1651 = vmatpush1.msra.mxu0 0.0
    %1652 = vmatprep.subr.mxu0 0.0
    %1653 = vmatpush1.msra.mxu0 0.0
    %1654 = vmatprep.mubr.f32.mxu0 0.0
    %1655 = vmatmul.mubr.f32.gmra.mrb[0].mxu0 %v1517
    %v1656 = vpop.f32.mrb[0].mxu0
    %v1657 = vadd.f32 0.0, %v1656
    %v1658 = vpop.f32.mrb[0].mxu0
    %v1659 = vadd.f32 0.0, %v1658
    %1660 = vdwg.mxu0
    %v1665 = vrot.slane %v1586, 1
    %v1666 = vrot.slane %v1588, 1
    %v1667 = vrot.slane %v1657, 1
    %v1668 = vrot.slane %v1659, 1
    %v1673 = vadd.f32 %v124, %v1665
    %v1674 = vadd.f32 %v126, %v1666
    %v1675 = vadd.f32 %v195, %v1667
    %v1676 = vadd.f32 %v197, %v1668
    %v1677 = vmul.f32 %v1673, 0.5
    %v1678 = vmul.f32 %v1674, 0.5
    %v1679 = vmul.f32 %v1675, 0.5
    %v1680 = vtanh.pop %v1677
    %v1681 = vtanh.pop %v1678
    %v1682 = vtanh.pop %v1679
    %v1683 = vadd.f32 %v1680, 1.0
    %v1684 = vadd.f32 %v1681, 1.0
    %v1685 = vadd.f32 %v1682, 1.0
    %v1686 = vmul.f32 %v1683, 0.5
    %v1687 = vmul.f32 %v1684, 0.5
    %v1688 = vmul.f32 %v1685, 0.5
    %v1689 = vtanh.pop %v1676
    %v1691 = vrot.slane %v1513, 7
    %v1693 = vmul.f32 %v1687, %v1691
    %v1694 = vmul.f32 %v1686, %v1689
    %v1695 = vadd.f32 %v1693, %v1694
    %v1696 = vtanh.pop %v1695
    %v1697 = vmul.f32 %v1688, %v1696
    %v1698 = vld [vmem:[%s4] sm:$0x1]
    %v1700 = vlaneseq
    %v1701 = vshrl.u32 %v1700, 7
    %v1702 = vsub.s32 0, %v1701
    %v1703 = vrot.slane %v1698, %v1702
    %v1705 = vmul.f32 %v1697, %v1703
    %vm1706 = vcmask 1047559
    %v1707 = vsel %vm1706, %v1705, 0.0
    %1708 = vadd.xlane.f32.xlu0 %v1707
    %v1709 = vpop.xlane.xlu0 %1708
    %v1710 = vld [vmem:[#allocation3] sm:$0x1]
    %v1712 = vlaneseq
    %v1713 = vshrl.u32 %v1712, 7
    %v1714 = vsub.s32 0, %v1713
    %v1715 = vrot.slane %v1710, %v1714
    %v1717 = vadd.f32 %v1709, %v1715
    %vm1718 = vcmask 7175
    %1719 = vst.msk [vmem:[#allocation4 - $0x7] sm:$0x80] %vm1718, %v1717
    // Predicated region
    $region26: #{lstm_forward_pallas.1} parent=1 // pred_check
      _
    $region27: #{lstm_forward_pallas.1} parent=1 // pred_check_branch
      %1721 = sbr.rel (0) target = $region29
    $region28: #{lstm_forward_pallas.1} parent=1 // pred_region
      %s1723 = ssub.s32 16, 16
      %1724 = vsyncadd [#allocation5], %s1723
      %s1726 = sshll.u32 [#allocation4], 4
      %s1727 = int_to_ptr.vmem [resolvable:$true] %s1726
      %1729 = dma.vmem_to_hbm [thread:$0]  %s1727, 16, %s6, [#allocation5]
    $region29: #{lstm_forward_pallas.1} parent=1 // pred_fallthru
      _
    // Predicated region
    $region30: #{lstm_forward_pallas.1} parent=1 // pred_check
      _
    $region31: #{lstm_forward_pallas.1} parent=1 // pred_check_branch
      %1731 = sbr.rel (0) target = $region33
    $region32: #{lstm_forward_pallas.1} parent=1 // pred_region
      %1732 = dma.done [#allocation5], 16
    $region33: #{lstm_forward_pallas.1} parent=1 // pred_fallthru
      _
    %1733 = vsyncpa [#allocation5], 1

</llo_original>
